<compile_context>
chip_gen: v7x
topology: tpu7x:2x2x1
jax: 0.10.0
libtpu: 0.0.40
codegen_flags: <defaults>
</compile_context>

<pallas_src>
import functools

import jax
import jax.numpy as jnp
from jax.experimental import pallas as pl
from jax.experimental.pallas import tpu as pltpu


# --------------------------------------------------------------------------------------
# Recurrence kernel: one grid step == one direction x one block of TBLK timesteps.
# --------------------------------------------------------------------------------------
def _gru_recurrence_kernel(gi_ref, whh_ref, bhh_ref, out_ref, h_ref, *, tblk):
    """GRU recurrence over a block of timesteps.

    gi_ref : (3, TBLK, B, H)  precomputed x @ W_ih^T + b_ih, per gate [r, z, n]
    whh_ref: (3, H, H)        per-gate W_hh^T (gh_g = h @ whh_ref[g])
    bhh_ref: (3, 1, H)        per-gate b_hh
    out_ref: (B, H)           final hidden for this direction (written on last block)
    h_ref  : (B, H) f32       carried hidden state across time blocks (VMEM scratch)
    """
    d = pl.program_id(0)        # direction: 0 = forward, 1 = backward
    tb = pl.program_id(1)       # time-block index
    nb = pl.num_programs(1)

    @pl.when(tb == 0)
    def _():
        h_ref[...] = jnp.zeros_like(h_ref)

    whh_r = whh_ref[0]
    whh_z = whh_ref[1]
    whh_n = whh_ref[2]
    bhh_r = bhh_ref[0]          # (1, H) broadcasts over (B, H)
    bhh_z = bhh_ref[1]
    bhh_n = bhh_ref[2]

    def step(i, h):
        # forward direction walks 0..tblk-1; backward walks tblk-1..0
        tt = i + d * (tblk - 1 - 2 * i)
        gi_r = gi_ref[0, tt]
        gi_z = gi_ref[1, tt]
        gi_n = gi_ref[2, tt]

        h_in = h.astype(whh_r.dtype)
        gh_r = jnp.dot(h_in, whh_r, preferred_element_type=jnp.float32) + bhh_r
        gh_z = jnp.dot(h_in, whh_z, preferred_element_type=jnp.float32) + bhh_z
        gh_n = jnp.dot(h_in, whh_n, preferred_element_type=jnp.float32) + bhh_n

        r = jax.nn.sigmoid(gi_r + gh_r)
        z = jax.nn.sigmoid(gi_z + gh_z)
        n = jnp.tanh(gi_n + r * gh_n)
        return (1.0 - z) * n + z * h

    h = jax.lax.fori_loop(0, tblk, step, h_ref[...], unroll=True)
    h_ref[...] = h

    @pl.when(tb == nb - 1)
    def _():
        out_ref[...] = h.astype(out_ref.dtype)


def _pick_time_block(T, B, H, itemsize, vmem_budget=16 * 1024 * 1024):
    """Largest divisor of T (<=32) whose double-buffered gi block fits the VMEM budget."""
    weight_bytes = 2 * (3 * H * H + 3 * H) * itemsize          # double-buffered weights
    per_step = 2 * 3 * B * H * itemsize                        # double-buffered gi step
    gi_budget = max(vmem_budget - weight_bytes, per_step)
    limit = max(1, min(T, 32, gi_budget // per_step))
    for cand in range(int(limit), 0, -1):
        if T % cand == 0:
            return cand
    return 1


def _gru_recurrence(gi, whh_t, bhh, out_dtype, tblk):
    """Run the blocked recurrence. gi: (ndir, 3, T, B, H) -> final hidden (ndir, B, H)."""
    ndir, _, T, B, H = gi.shape
    nb = T // tblk

    def gi_index_map(d, tb):
        # forward: time blocks 0..nb-1; backward: nb-1..0 (reads the SAME buffer)
        return (d, 0, tb + d * (nb - 1 - 2 * tb), 0, 0)

    grid_spec = pltpu.PrefetchScalarGridSpec(
        num_scalar_prefetch=0,
        grid=(ndir, nb),
        in_specs=[
            pl.BlockSpec((None, 3, tblk, B, H), gi_index_map),
            pl.BlockSpec((None, 3, H, H), lambda d, tb: (d, 0, 0, 0)),
            pl.BlockSpec((None, 3, 1, H), lambda d, tb: (d, 0, 0, 0)),
        ],
        out_specs=pl.BlockSpec((None, B, H), lambda d, tb: (d, 0, 0)),
        scratch_shapes=[pltpu.VMEM((B, H), jnp.float32)],
    )

    return pl.pallas_call(
        functools.partial(_gru_recurrence_kernel, tblk=tblk),
        out_shape=jax.ShapeDtypeStruct((ndir, B, H), out_dtype),
        grid_spec=grid_spec,
        compiler_params=pltpu.CompilerParams(
            # direction axis is independent (megacore-shardable); time axis is serial
            dimension_semantics=("parallel", "arbitrary"),
            vmem_limit_bytes=32 * 1024 * 1024,
        ),
    )(gi, whh_t, bhh)


# --------------------------------------------------------------------------------------
# Module wrapper
# --------------------------------------------------------------------------------------
class QuestionEmbeddingPallas:
    """JAX/Pallas port of the PyTorch QuestionEmbedding module (GRU, nlayers=1)."""

    def __init__(self, in_dim, num_hid, nlayers=1, bidirect=False, dropout=0.0,
                 rnn_type="GRU", key=jax.random.PRNGKey(0),
                 compute_dtype=jnp.float32):
        assert rnn_type == "GRU", "only the default GRU path is implemented"
        assert nlayers == 1, "only nlayers=1 is implemented"
        self.in_dim = in_dim
        self.num_hid = num_hid
        self.ndirections = 1 + int(bidirect)
        self.compute_dtype = compute_dtype

        # PyTorch-style uniform(-1/sqrt(H), 1/sqrt(H)) init, deterministic.
        bound = 1.0 / float(num_hid) ** 0.5
        k0, k1, k2, k3 = jax.random.split(key, 4)
        nd, H, D = self.ndirections, num_hid, in_dim

        def u(k, shape):
            return jax.random.uniform(k, shape, jnp.float32, -bound, bound)

        # Gate order [r, z, n], per direction, per gate.
        self.w_ih = u(k0, (nd, 3, H, D))                      # W_ih   (row layout)
        self.w_hh_t = jnp.swapaxes(u(k1, (nd, 3, H, H)), -1, -2)  # W_hh^T per gate
        self.b_ih = u(k2, (nd, 3, H))
        self.b_hh = u(k3, (nd, 3, H))[:, :, None, :]          # (nd, 3, 1, H)

    def __call__(self, x):
        # x: (B, T, D) batch_first, like the PyTorch module.
        B, T, D = x.shape
        assert D == self.in_dim
        out_dtype = x.dtype
        H = self.num_hid
        cd = self.compute_dtype

        # Pad batch to a sublane multiple so the recurrent state stays vreg-dense.
        Bp = ((B + 7) // 8) * 8
        if Bp != B:
            x = jnp.pad(x, ((0, Bp - B), (0, 0), (0, 0)))

        # Hoisted input projection: one big batched matmul over all timesteps, laid out
        # time-major / per-gate; the layout change is folded into the matmul output
        # (no explicit HBM transpose of x).
        gi = jnp.einsum("btd,kghd->kgtbh",
                        x.astype(cd), self.w_ih.astype(cd),
                        preferred_element_type=jnp.float32)
        gi = (gi + self.b_ih[:, :, None, None, :]).astype(cd)   # (ndir, 3, T, Bp, H)

        tblk = _pick_time_block(T, Bp, H, jnp.dtype(cd).itemsize)
        out = _gru_recurrence(gi, self.w_hh_t.astype(cd), self.b_hh,
                              out_dtype, tblk)                   # (ndir, Bp, H)
        out = out[:, :B]
        if self.ndirections == 1:
            return out[0]
        return jnp.concatenate([out[0], out[1]], axis=1)

    # Pure-JAX reference (lax.scan) for correctness checks.
    def reference(self, x):
        x = x.astype(jnp.float32)
        hs = []
        for d in range(self.ndirections):
            xd = x if d == 0 else x[:, ::-1]
            hs.append(_gru_reference_dir(xd, self.w_ih[d], self.b_ih[d],
                                         self.w_hh_t[d], self.b_hh[d]))
        return hs[0] if self.ndirections == 1 else jnp.concatenate(hs, axis=1)


def _gru_reference_dir(x, w_ih, b_ih, w_hh_t, b_hh):
    B, T, D = x.shape
    H = w_ih.shape[1]
    h0 = jnp.zeros((B, H), jnp.float32)

    def step(h, x_t):
        gi = [x_t @ w_ih[g].T + b_ih[g] for g in range(3)]
        gh = [h @ w_hh_t[g] + b_hh[g] for g in range(3)]
        r = jax.nn.sigmoid(gi[0] + gh[0])
        z = jax.nn.sigmoid(gi[1] + gh[1])
        n = jnp.tanh(gi[2] + r * gh[2])
        return (1.0 - z) * n + z * h, None

    h_last, _ = jax.lax.scan(step, h0, jnp.transpose(x, (1, 0, 2)))
    return h_last


if __name__ == "__main__":
    B, T, D, H = 8, 8, 32, 32   # batch, seq_len, in_dim, num_hid

    key = jax.random.PRNGKey(0)
    k_x, k_p1, k_p2 = jax.random.split(key, 3)
    x = jax.random.normal(k_x, (B, T, D), jnp.float32)

    # Unidirectional.
    model = QuestionEmbeddingPallas(in_dim=D, num_hid=H, nlayers=1, bidirect=False,
                                    dropout=0.0, rnn_type="GRU", key=k_p1)
    out = jax.block_until_ready(model(x))
    assert out.shape == (B, H), out.shape
    ref = model.reference(x)
    assert jnp.allclose(out, ref, atol=1e-4, rtol=1e-4), "unidirectional mismatch"

    # Bidirectional (forward final hidden ++ backward final hidden).
    model_bi = QuestionEmbeddingPallas(in_dim=D, num_hid=H, nlayers=1, bidirect=True,
                                       dropout=0.0, rnn_type="GRU", key=k_p2)
    out_bi = jax.block_until_ready(model_bi(x))
    assert out_bi.shape == (B, 2 * H), out_bi.shape
    ref_bi = model_bi.reference(x)
    assert jnp.allclose(out_bi, ref_bi, atol=1e-4, rtol=1e-4), "bidirectional mismatch"

    # Odd batch (exercises the sublane-padding path).
    out_odd = jax.block_until_ready(model(x[:5]))
    assert out_odd.shape == (5, H), out_odd.shape
    ref_odd = model.reference(x[:5])
    assert jnp.allclose(out_odd, ref_odd, atol=1e-4, rtol=1e-4), "odd-batch mismatch"

    print("KERNEL_OK")
</pallas_src>

<mosaic_0001>
module attributes {stable_mosaic.version = 11 : i64} {
  func.func @_gru_recurrence_kernel(%arg0: i32, %arg1: i32, %arg2: memref<1x3x8x8x32xf32, #tpu.memory_space<vmem>>, %arg3: memref<1x3x32x32xf32, #tpu.memory_space<vmem>>, %arg4: memref<1x3x1x32xf32, #tpu.memory_space<vmem>>, %arg5: memref<1x8x32xf32, #tpu.memory_space<vmem>>, %arg6: memref<8x32xf32, #tpu.memory_space<vmem>>) attributes {dimension_semantics = [#tpu.dimension_semantics<parallel>, #tpu.dimension_semantics<arbitrary>], iteration_bounds = array<i64: 1, 1>, scalar_prefetch = 0 : i64, scratch_operands = 1 : i64, tpu.core_type = #tpu.core_type<tc>, window_params = [{transform_indices = @transform_0, window_bounds = array<i64: 1, 3, 8, 8, 32>}, {transform_indices = @transform_1, window_bounds = array<i64: 1, 3, 32, 32>}, {transform_indices = @transform_2, window_bounds = array<i64: 1, 3, 1, 32>}, {transform_indices = @transform_3, window_bounds = array<i64: 1, 8, 32>}]} {
    %c0_i32 = arith.constant 0 : i32
    %0 = arith.cmpi eq, %arg1, %c0_i32 : i32
    %1 = arith.extui %0 : i1 to i32
    %c0_i32_0 = arith.constant 0 : i32
    %2 = arith.cmpi ne, %1, %c0_i32_0 : i32
    scf.if %2 {
      %cst_188 = arith.constant 0.000000e+00 : f32
      %356 = vector.broadcast %cst_188 : f32 to vector<8x32xf32>
      %c0_189 = arith.constant 0 : index
      %c0_190 = arith.constant 0 : index
      %357 = vector.load %arg6[%c0_189, %c0_190] : memref<8x32xf32, #tpu.memory_space<vmem>>, vector<8x32xf32>
      tpu.vector_store %arg6[%c0_189, %c0_190], %356 {strides = array<i32>} : memref<8x32xf32, #tpu.memory_space<vmem>>, vector<8x32xf32>,
    } else {
    }
    %c0 = arith.constant 0 : index
    %c0_1 = arith.constant 0 : index
    %c0_2 = arith.constant 0 : index
    %c0_3 = arith.constant 0 : index
    %3 = vector.load %arg3[%c0, %c0_1, %c0_2, %c0_3] : memref<1x3x32x32xf32, #tpu.memory_space<vmem>>, vector<1x1x32x32xf32>
    %4 = vector.shape_cast %3 : vector<1x1x32x32xf32> to vector<32x32xf32>
    %c0_4 = arith.constant 0 : index
    %c1 = arith.constant 1 : index
    %c0_5 = arith.constant 0 : index
    %c0_6 = arith.constant 0 : index
    %5 = vector.load %arg3[%c0_4, %c1, %c0_5, %c0_6] : memref<1x3x32x32xf32, #tpu.memory_space<vmem>>, vector<1x1x32x32xf32>
    %6 = vector.shape_cast %5 : vector<1x1x32x32xf32> to vector<32x32xf32>
    %c0_7 = arith.constant 0 : index
    %c2 = arith.constant 2 : index
    %c0_8 = arith.constant 0 : index
    %c0_9 = arith.constant 0 : index
    %7 = vector.load %arg3[%c0_7, %c2, %c0_8, %c0_9] : memref<1x3x32x32xf32, #tpu.memory_space<vmem>>, vector<1x1x32x32xf32>
    %8 = vector.shape_cast %7 : vector<1x1x32x32xf32> to vector<32x32xf32>
    %c0_10 = arith.constant 0 : index
    %c0_11 = arith.constant 0 : index
    %c0_12 = arith.constant 0 : index
    %c0_13 = arith.constant 0 : index
    %9 = vector.load %arg4[%c0_10, %c0_11, %c0_12, %c0_13] : memref<1x3x1x32xf32, #tpu.memory_space<vmem>>, vector<1x1x1x32xf32>
    %10 = vector.shape_cast %9 : vector<1x1x1x32xf32> to vector<1x32xf32>
    %c0_14 = arith.constant 0 : index
    %c1_15 = arith.constant 1 : index
    %c0_16 = arith.constant 0 : index
    %c0_17 = arith.constant 0 : index
    %11 = vector.load %arg4[%c0_14, %c1_15, %c0_16, %c0_17] : memref<1x3x1x32xf32, #tpu.memory_space<vmem>>, vector<1x1x1x32xf32>
    %12 = vector.shape_cast %11 : vector<1x1x1x32xf32> to vector<1x32xf32>
    %c0_18 = arith.constant 0 : index
    %c2_19 = arith.constant 2 : index
    %c0_20 = arith.constant 0 : index
    %c0_21 = arith.constant 0 : index
    %13 = vector.load %arg4[%c0_18, %c2_19, %c0_20, %c0_21] : memref<1x3x1x32xf32, #tpu.memory_space<vmem>>, vector<1x1x1x32xf32>
    %14 = vector.shape_cast %13 : vector<1x1x1x32xf32> to vector<1x32xf32>
    %c0_22 = arith.constant 0 : index
    %c0_23 = arith.constant 0 : index
    %15 = vector.load %arg6[%c0_22, %c0_23] : memref<8x32xf32, #tpu.memory_space<vmem>>, vector<8x32xf32>
    %c0_i32_24 = arith.constant 0 : i32
    %c2_i32 = arith.constant 2 : i32
    %16 = arith.muli %c2_i32, %c0_i32_24 : i32
    %c7_i32 = arith.constant 7 : i32
    %17 = arith.subi %c7_i32, %16 : i32
    %18 = arith.muli %arg0, %17 : i32
    %19 = arith.addi %c0_i32_24, %18 : i32
    %c0_25 = arith.constant 0 : index
    %c0_26 = arith.constant 0 : index
    %20 = arith.index_cast %19 : i32 to index
    %c0_27 = arith.constant 0 : index
    %c0_28 = arith.constant 0 : index
    %21 = vector.load %arg2[%c0_25, %c0_26, %20, %c0_27, %c0_28] : memref<1x3x8x8x32xf32, #tpu.memory_space<vmem>>, vector<1x1x1x8x32xf32>
    %22 = vector.shape_cast %21 : vector<1x1x1x8x32xf32> to vector<8x32xf32>
    %c0_29 = arith.constant 0 : index
    %c1_30 = arith.constant 1 : index
    %23 = arith.index_cast %19 : i32 to index
    %c0_31 = arith.constant 0 : index
    %c0_32 = arith.constant 0 : index
    %24 = vector.load %arg2[%c0_29, %c1_30, %23, %c0_31, %c0_32] : memref<1x3x8x8x32xf32, #tpu.memory_space<vmem>>, vector<1x1x1x8x32xf32>
    %25 = vector.shape_cast %24 : vector<1x1x1x8x32xf32> to vector<8x32xf32>
    %c0_33 = arith.constant 0 : index
    %c2_34 = arith.constant 2 : index
    %26 = arith.index_cast %19 : i32 to index
    %c0_35 = arith.constant 0 : index
    %c0_36 = arith.constant 0 : index
    %27 = vector.load %arg2[%c0_33, %c2_34, %26, %c0_35, %c0_36] : memref<1x3x8x8x32xf32, #tpu.memory_space<vmem>>, vector<1x1x1x8x32xf32>
    %28 = vector.shape_cast %27 : vector<1x1x1x8x32xf32> to vector<8x32xf32>
    %cst = arith.constant dense<0.000000e+00> : vector<8x32xf32>
    %29 = tpu.matmul %15, %4, %cst {dimension_numbers = #tpu.dot_dimension_numbers<[1], [0], [0], [1], [0, 0, 1, 1], [], []>} : vector<8x32xf32>, vector<32x32xf32>, vector<8x32xf32> -> vector<8x32xf32>
    %30 = vector.broadcast %10 : vector<1x32xf32> to vector<8x32xf32>
    %31 = arith.addf %29, %30 : vector<8x32xf32>
    %cst_37 = arith.constant dense<0.000000e+00> : vector<8x32xf32>
    %32 = tpu.matmul %15, %6, %cst_37 {dimension_numbers = #tpu.dot_dimension_numbers<[1], [0], [0], [1], [0, 0, 1, 1], [], []>} : vector<8x32xf32>, vector<32x32xf32>, vector<8x32xf32> -> vector<8x32xf32>
    %33 = vector.broadcast %12 : vector<1x32xf32> to vector<8x32xf32>
    %34 = arith.addf %32, %33 : vector<8x32xf32>
    %cst_38 = arith.constant dense<0.000000e+00> : vector<8x32xf32>
    %35 = tpu.matmul %15, %8, %cst_38 {dimension_numbers = #tpu.dot_dimension_numbers<[1], [0], [0], [1], [0, 0, 1, 1], [], []>} : vector<8x32xf32>, vector<32x32xf32>, vector<8x32xf32> -> vector<8x32xf32>
    %36 = vector.broadcast %14 : vector<1x32xf32> to vector<8x32xf32>
    %37 = arith.addf %35, %36 : vector<8x32xf32>
    %38 = arith.addf %22, %31 : vector<8x32xf32>
    %39 = arith.negf %38 : vector<8x32xf32>
    %40 = math.exp %39 : vector<8x32xf32>
    %cst_39 = arith.constant 1.000000e+00 : f32
    %41 = vector.broadcast %cst_39 : f32 to vector<8x32xf32>
    %42 = arith.addf %41, %40 : vector<8x32xf32>
    %43 = arith.divf %41, %42 : vector<8x32xf32>
    %44 = arith.addf %25, %34 : vector<8x32xf32>
    %45 = arith.negf %44 : vector<8x32xf32>
    %46 = math.exp %45 : vector<8x32xf32>
    %cst_40 = arith.constant 1.000000e+00 : f32
    %47 = vector.broadcast %cst_40 : f32 to vector<8x32xf32>
    %48 = arith.addf %47, %46 : vector<8x32xf32>
    %49 = arith.divf %47, %48 : vector<8x32xf32>
    %50 = arith.mulf %43, %37 : vector<8x32xf32>
    %51 = arith.addf %28, %50 : vector<8x32xf32>
    %52 = math.tanh %51 : vector<8x32xf32>
    %cst_41 = arith.constant 1.000000e+00 : f32
    %53 = vector.broadcast %cst_41 : f32 to vector<8x32xf32>
    %54 = arith.subf %53, %49 : vector<8x32xf32>
    %55 = arith.mulf %54, %52 : vector<8x32xf32>
    %56 = arith.mulf %49, %15 : vector<8x32xf32>
    %57 = arith.addf %55, %56 : vector<8x32xf32>
    %c1_i32 = arith.constant 1 : i32
    %c2_i32_42 = arith.constant 2 : i32
    %58 = arith.muli %c2_i32_42, %c1_i32 : i32
    %c7_i32_43 = arith.constant 7 : i32
    %59 = arith.subi %c7_i32_43, %58 : i32
    %60 = arith.muli %arg0, %59 : i32
    %61 = arith.addi %c1_i32, %60 : i32
    %c0_44 = arith.constant 0 : index
    %c0_45 = arith.constant 0 : index
    %62 = arith.index_cast %61 : i32 to index
    %c0_46 = arith.constant 0 : index
    %c0_47 = arith.constant 0 : index
    %63 = vector.load %arg2[%c0_44, %c0_45, %62, %c0_46, %c0_47] : memref<1x3x8x8x32xf32, #tpu.memory_space<vmem>>, vector<1x1x1x8x32xf32>
    %64 = vector.shape_cast %63 : vector<1x1x1x8x32xf32> to vector<8x32xf32>
    %c0_48 = arith.constant 0 : index
    %c1_49 = arith.constant 1 : index
    %65 = arith.index_cast %61 : i32 to index
    %c0_50 = arith.constant 0 : index
    %c0_51 = arith.constant 0 : index
    %66 = vector.load %arg2[%c0_48, %c1_49, %65, %c0_50, %c0_51] : memref<1x3x8x8x32xf32, #tpu.memory_space<vmem>>, vector<1x1x1x8x32xf32>
    %67 = vector.shape_cast %66 : vector<1x1x1x8x32xf32> to vector<8x32xf32>
    %c0_52 = arith.constant 0 : index
    %c2_53 = arith.constant 2 : index
    %68 = arith.index_cast %61 : i32 to index
    %c0_54 = arith.constant 0 : index
    %c0_55 = arith.constant 0 : index
    %69 = vector.load %arg2[%c0_52, %c2_53, %68, %c0_54, %c0_55] : memref<1x3x8x8x32xf32, #tpu.memory_space<vmem>>, vector<1x1x1x8x32xf32>
    %70 = vector.shape_cast %69 : vector<1x1x1x8x32xf32> to vector<8x32xf32>
    %cst_56 = arith.constant dense<0.000000e+00> : vector<8x32xf32>
    %71 = tpu.matmul %57, %4, %cst_56 {dimension_numbers = #tpu.dot_dimension_numbers<[1], [0], [0], [1], [0, 0, 1, 1], [], []>} : vector<8x32xf32>, vector<32x32xf32>, vector<8x32xf32> -> vector<8x32xf32>
    %72 = vector.broadcast %10 : vector<1x32xf32> to vector<8x32xf32>
    %73 = arith.addf %71, %72 : vector<8x32xf32>
    %cst_57 = arith.constant dense<0.000000e+00> : vector<8x32xf32>
    %74 = tpu.matmul %57, %6, %cst_57 {dimension_numbers = #tpu.dot_dimension_numbers<[1], [0], [0], [1], [0, 0, 1, 1], [], []>} : vector<8x32xf32>, vector<32x32xf32>, vector<8x32xf32> -> vector<8x32xf32>
    %75 = vector.broadcast %12 : vector<1x32xf32> to vector<8x32xf32>
    %76 = arith.addf %74, %75 : vector<8x32xf32>
    %cst_58 = arith.constant dense<0.000000e+00> : vector<8x32xf32>
    %77 = tpu.matmul %57, %8, %cst_58 {dimension_numbers = #tpu.dot_dimension_numbers<[1], [0], [0], [1], [0, 0, 1, 1], [], []>} : vector<8x32xf32>, vector<32x32xf32>, vector<8x32xf32> -> vector<8x32xf32>
    %78 = vector.broadcast %14 : vector<1x32xf32> to vector<8x32xf32>
    %79 = arith.addf %77, %78 : vector<8x32xf32>
    %80 = arith.addf %64, %73 : vector<8x32xf32>
    %81 = arith.negf %80 : vector<8x32xf32>
    %82 = math.exp %81 : vector<8x32xf32>
    %cst_59 = arith.constant 1.000000e+00 : f32
    %83 = vector.broadcast %cst_59 : f32 to vector<8x32xf32>
    %84 = arith.addf %83, %82 : vector<8x32xf32>
    %85 = arith.divf %83, %84 : vector<8x32xf32>
    %86 = arith.addf %67, %76 : vector<8x32xf32>
    %87 = arith.negf %86 : vector<8x32xf32>
    %88 = math.exp %87 : vector<8x32xf32>
    %cst_60 = arith.constant 1.000000e+00 : f32
    %89 = vector.broadcast %cst_60 : f32 to vector<8x32xf32>
    %90 = arith.addf %89, %88 : vector<8x32xf32>
    %91 = arith.divf %89, %90 : vector<8x32xf32>
    %92 = arith.mulf %85, %79 : vector<8x32xf32>
    %93 = arith.addf %70, %92 : vector<8x32xf32>
    %94 = math.tanh %93 : vector<8x32xf32>
    %cst_61 = arith.constant 1.000000e+00 : f32
    %95 = vector.broadcast %cst_61 : f32 to vector<8x32xf32>
    %96 = arith.subf %95, %91 : vector<8x32xf32>
    %97 = arith.mulf %96, %94 : vector<8x32xf32>
    %98 = arith.mulf %91, %57 : vector<8x32xf32>
    %99 = arith.addf %97, %98 : vector<8x32xf32>
    %c2_i32_62 = arith.constant 2 : i32
    %c2_i32_63 = arith.constant 2 : i32
    %100 = arith.muli %c2_i32_63, %c2_i32_62 : i32
    %c7_i32_64 = arith.constant 7 : i32
    %101 = arith.subi %c7_i32_64, %100 : i32
    %102 = arith.muli %arg0, %101 : i32
    %103 = arith.addi %c2_i32_62, %102 : i32
    %c0_65 = arith.constant 0 : index
    %c0_66 = arith.constant 0 : index
    %104 = arith.index_cast %103 : i32 to index
    %c0_67 = arith.constant 0 : index
    %c0_68 = arith.constant 0 : index
    %105 = vector.load %arg2[%c0_65, %c0_66, %104, %c0_67, %c0_68] : memref<1x3x8x8x32xf32, #tpu.memory_space<vmem>>, vector<1x1x1x8x32xf32>
    %106 = vector.shape_cast %105 : vector<1x1x1x8x32xf32> to vector<8x32xf32>
    %c0_69 = arith.constant 0 : index
    %c1_70 = arith.constant 1 : index
    %107 = arith.index_cast %103 : i32 to index
    %c0_71 = arith.constant 0 : index
    %c0_72 = arith.constant 0 : index
    %108 = vector.load %arg2[%c0_69, %c1_70, %107, %c0_71, %c0_72] : memref<1x3x8x8x32xf32, #tpu.memory_space<vmem>>, vector<1x1x1x8x32xf32>
    %109 = vector.shape_cast %108 : vector<1x1x1x8x32xf32> to vector<8x32xf32>
    %c0_73 = arith.constant 0 : index
    %c2_74 = arith.constant 2 : index
    %110 = arith.index_cast %103 : i32 to index
    %c0_75 = arith.constant 0 : index
    %c0_76 = arith.constant 0 : index
    %111 = vector.load %arg2[%c0_73, %c2_74, %110, %c0_75, %c0_76] : memref<1x3x8x8x32xf32, #tpu.memory_space<vmem>>, vector<1x1x1x8x32xf32>
    %112 = vector.shape_cast %111 : vector<1x1x1x8x32xf32> to vector<8x32xf32>
    %cst_77 = arith.constant dense<0.000000e+00> : vector<8x32xf32>
    %113 = tpu.matmul %99, %4, %cst_77 {dimension_numbers = #tpu.dot_dimension_numbers<[1], [0], [0], [1], [0, 0, 1, 1], [], []>} : vector<8x32xf32>, vector<32x32xf32>, vector<8x32xf32> -> vector<8x32xf32>
    %114 = vector.broadcast %10 : vector<1x32xf32> to vector<8x32xf32>
    %115 = arith.addf %113, %114 : vector<8x32xf32>
    %cst_78 = arith.constant dense<0.000000e+00> : vector<8x32xf32>
    %116 = tpu.matmul %99, %6, %cst_78 {dimension_numbers = #tpu.dot_dimension_numbers<[1], [0], [0], [1], [0, 0, 1, 1], [], []>} : vector<8x32xf32>, vector<32x32xf32>, vector<8x32xf32> -> vector<8x32xf32>
    %117 = vector.broadcast %12 : vector<1x32xf32> to vector<8x32xf32>
    %118 = arith.addf %116, %117 : vector<8x32xf32>
    %cst_79 = arith.constant dense<0.000000e+00> : vector<8x32xf32>
    %119 = tpu.matmul %99, %8, %cst_79 {dimension_numbers = #tpu.dot_dimension_numbers<[1], [0], [0], [1], [0, 0, 1, 1], [], []>} : vector<8x32xf32>, vector<32x32xf32>, vector<8x32xf32> -> vector<8x32xf32>
    %120 = vector.broadcast %14 : vector<1x32xf32> to vector<8x32xf32>
    %121 = arith.addf %119, %120 : vector<8x32xf32>
    %122 = arith.addf %106, %115 : vector<8x32xf32>
    %123 = arith.negf %122 : vector<8x32xf32>
    %124 = math.exp %123 : vector<8x32xf32>
    %cst_80 = arith.constant 1.000000e+00 : f32
    %125 = vector.broadcast %cst_80 : f32 to vector<8x32xf32>
    %126 = arith.addf %125, %124 : vector<8x32xf32>
    %127 = arith.divf %125, %126 : vector<8x32xf32>
    %128 = arith.addf %109, %118 : vector<8x32xf32>
    %129 = arith.negf %128 : vector<8x32xf32>
    %130 = math.exp %129 : vector<8x32xf32>
    %cst_81 = arith.constant 1.000000e+00 : f32
    %131 = vector.broadcast %cst_81 : f32 to vector<8x32xf32>
    %132 = arith.addf %131, %130 : vector<8x32xf32>
    %133 = arith.divf %131, %132 : vector<8x32xf32>
    %134 = arith.mulf %127, %121 : vector<8x32xf32>
    %135 = arith.addf %112, %134 : vector<8x32xf32>
    %136 = math.tanh %135 : vector<8x32xf32>
    %cst_82 = arith.constant 1.000000e+00 : f32
    %137 = vector.broadcast %cst_82 : f32 to vector<8x32xf32>
    %138 = arith.subf %137, %133 : vector<8x32xf32>
    %139 = arith.mulf %138, %136 : vector<8x32xf32>
    %140 = arith.mulf %133, %99 : vector<8x32xf32>
    %141 = arith.addf %139, %140 : vector<8x32xf32>
    %c3_i32 = arith.constant 3 : i32
    %c2_i32_83 = arith.constant 2 : i32
    %142 = arith.muli %c2_i32_83, %c3_i32 : i32
    %c7_i32_84 = arith.constant 7 : i32
    %143 = arith.subi %c7_i32_84, %142 : i32
    %144 = arith.muli %arg0, %143 : i32
    %145 = arith.addi %c3_i32, %144 : i32
    %c0_85 = arith.constant 0 : index
    %c0_86 = arith.constant 0 : index
    %146 = arith.index_cast %145 : i32 to index
    %c0_87 = arith.constant 0 : index
    %c0_88 = arith.constant 0 : index
    %147 = vector.load %arg2[%c0_85, %c0_86, %146, %c0_87, %c0_88] : memref<1x3x8x8x32xf32, #tpu.memory_space<vmem>>, vector<1x1x1x8x32xf32>
    %148 = vector.shape_cast %147 : vector<1x1x1x8x32xf32> to vector<8x32xf32>
    %c0_89 = arith.constant 0 : index
    %c1_90 = arith.constant 1 : index
    %149 = arith.index_cast %145 : i32 to index
    %c0_91 = arith.constant 0 : index
    %c0_92 = arith.constant 0 : index
    %150 = vector.load %arg2[%c0_89, %c1_90, %149, %c0_91, %c0_92] : memref<1x3x8x8x32xf32, #tpu.memory_space<vmem>>, vector<1x1x1x8x32xf32>
    %151 = vector.shape_cast %150 : vector<1x1x1x8x32xf32> to vector<8x32xf32>
    %c0_93 = arith.constant 0 : index
    %c2_94 = arith.constant 2 : index
    %152 = arith.index_cast %145 : i32 to index
    %c0_95 = arith.constant 0 : index
    %c0_96 = arith.constant 0 : index
    %153 = vector.load %arg2[%c0_93, %c2_94, %152, %c0_95, %c0_96] : memref<1x3x8x8x32xf32, #tpu.memory_space<vmem>>, vector<1x1x1x8x32xf32>
    %154 = vector.shape_cast %153 : vector<1x1x1x8x32xf32> to vector<8x32xf32>
    %cst_97 = arith.constant dense<0.000000e+00> : vector<8x32xf32>
    %155 = tpu.matmul %141, %4, %cst_97 {dimension_numbers = #tpu.dot_dimension_numbers<[1], [0], [0], [1], [0, 0, 1, 1], [], []>} : vector<8x32xf32>, vector<32x32xf32>, vector<8x32xf32> -> vector<8x32xf32>
    %156 = vector.broadcast %10 : vector<1x32xf32> to vector<8x32xf32>
    %157 = arith.addf %155, %156 : vector<8x32xf32>
    %cst_98 = arith.constant dense<0.000000e+00> : vector<8x32xf32>
    %158 = tpu.matmul %141, %6, %cst_98 {dimension_numbers = #tpu.dot_dimension_numbers<[1], [0], [0], [1], [0, 0, 1, 1], [], []>} : vector<8x32xf32>, vector<32x32xf32>, vector<8x32xf32> -> vector<8x32xf32>
    %159 = vector.broadcast %12 : vector<1x32xf32> to vector<8x32xf32>
    %160 = arith.addf %158, %159 : vector<8x32xf32>
    %cst_99 = arith.constant dense<0.000000e+00> : vector<8x32xf32>
    %161 = tpu.matmul %141, %8, %cst_99 {dimension_numbers = #tpu.dot_dimension_numbers<[1], [0], [0], [1], [0, 0, 1, 1], [], []>} : vector<8x32xf32>, vector<32x32xf32>, vector<8x32xf32> -> vector<8x32xf32>
    %162 = vector.broadcast %14 : vector<1x32xf32> to vector<8x32xf32>
    %163 = arith.addf %161, %162 : vector<8x32xf32>
    %164 = arith.addf %148, %157 : vector<8x32xf32>
    %165 = arith.negf %164 : vector<8x32xf32>
    %166 = math.exp %165 : vector<8x32xf32>
    %cst_100 = arith.constant 1.000000e+00 : f32
    %167 = vector.broadcast %cst_100 : f32 to vector<8x32xf32>
    %168 = arith.addf %167, %166 : vector<8x32xf32>
    %169 = arith.divf %167, %168 : vector<8x32xf32>
    %170 = arith.addf %151, %160 : vector<8x32xf32>
    %171 = arith.negf %170 : vector<8x32xf32>
    %172 = math.exp %171 : vector<8x32xf32>
    %cst_101 = arith.constant 1.000000e+00 : f32
    %173 = vector.broadcast %cst_101 : f32 to vector<8x32xf32>
    %174 = arith.addf %173, %172 : vector<8x32xf32>
    %175 = arith.divf %173, %174 : vector<8x32xf32>
    %176 = arith.mulf %169, %163 : vector<8x32xf32>
    %177 = arith.addf %154, %176 : vector<8x32xf32>
    %178 = math.tanh %177 : vector<8x32xf32>
    %cst_102 = arith.constant 1.000000e+00 : f32
    %179 = vector.broadcast %cst_102 : f32 to vector<8x32xf32>
    %180 = arith.subf %179, %175 : vector<8x32xf32>
    %181 = arith.mulf %180, %178 : vector<8x32xf32>
    %182 = arith.mulf %175, %141 : vector<8x32xf32>
    %183 = arith.addf %181, %182 : vector<8x32xf32>
    %c4_i32 = arith.constant 4 : i32
    %c2_i32_103 = arith.constant 2 : i32
    %184 = arith.muli %c2_i32_103, %c4_i32 : i32
    %c7_i32_104 = arith.constant 7 : i32
    %185 = arith.subi %c7_i32_104, %184 : i32
    %186 = arith.muli %arg0, %185 : i32
    %187 = arith.addi %c4_i32, %186 : i32
    %c0_105 = arith.constant 0 : index
    %c0_106 = arith.constant 0 : index
    %188 = arith.index_cast %187 : i32 to index
    %c0_107 = arith.constant 0 : index
    %c0_108 = arith.constant 0 : index
    %189 = vector.load %arg2[%c0_105, %c0_106, %188, %c0_107, %c0_108] : memref<1x3x8x8x32xf32, #tpu.memory_space<vmem>>, vector<1x1x1x8x32xf32>
    %190 = vector.shape_cast %189 : vector<1x1x1x8x32xf32> to vector<8x32xf32>
    %c0_109 = arith.constant 0 : index
    %c1_110 = arith.constant 1 : index
    %191 = arith.index_cast %187 : i32 to index
    %c0_111 = arith.constant 0 : index
    %c0_112 = arith.constant 0 : index
    %192 = vector.load %arg2[%c0_109, %c1_110, %191, %c0_111, %c0_112] : memref<1x3x8x8x32xf32, #tpu.memory_space<vmem>>, vector<1x1x1x8x32xf32>
    %193 = vector.shape_cast %192 : vector<1x1x1x8x32xf32> to vector<8x32xf32>
    %c0_113 = arith.constant 0 : index
    %c2_114 = arith.constant 2 : index
    %194 = arith.index_cast %187 : i32 to index
    %c0_115 = arith.constant 0 : index
    %c0_116 = arith.constant 0 : index
    %195 = vector.load %arg2[%c0_113, %c2_114, %194, %c0_115, %c0_116] : memref<1x3x8x8x32xf32, #tpu.memory_space<vmem>>, vector<1x1x1x8x32xf32>
    %196 = vector.shape_cast %195 : vector<1x1x1x8x32xf32> to vector<8x32xf32>
    %cst_117 = arith.constant dense<0.000000e+00> : vector<8x32xf32>
    %197 = tpu.matmul %183, %4, %cst_117 {dimension_numbers = #tpu.dot_dimension_numbers<[1], [0], [0], [1], [0, 0, 1, 1], [], []>} : vector<8x32xf32>, vector<32x32xf32>, vector<8x32xf32> -> vector<8x32xf32>
    %198 = vector.broadcast %10 : vector<1x32xf32> to vector<8x32xf32>
    %199 = arith.addf %197, %198 : vector<8x32xf32>
    %cst_118 = arith.constant dense<0.000000e+00> : vector<8x32xf32>
    %200 = tpu.matmul %183, %6, %cst_118 {dimension_numbers = #tpu.dot_dimension_numbers<[1], [0], [0], [1], [0, 0, 1, 1], [], []>} : vector<8x32xf32>, vector<32x32xf32>, vector<8x32xf32> -> vector<8x32xf32>
    %201 = vector.broadcast %12 : vector<1x32xf32> to vector<8x32xf32>
    %202 = arith.addf %200, %201 : vector<8x32xf32>
    %cst_119 = arith.constant dense<0.000000e+00> : vector<8x32xf32>
    %203 = tpu.matmul %183, %8, %cst_119 {dimension_numbers = #tpu.dot_dimension_numbers<[1], [0], [0], [1], [0, 0, 1, 1], [], []>} : vector<8x32xf32>, vector<32x32xf32>, vector<8x32xf32> -> vector<8x32xf32>
    %204 = vector.broadcast %14 : vector<1x32xf32> to vector<8x32xf32>
    %205 = arith.addf %203, %204 : vector<8x32xf32>
    %206 = arith.addf %190, %199 : vector<8x32xf32>
    %207 = arith.negf %206 : vector<8x32xf32>
    %208 = math.exp %207 : vector<8x32xf32>
    %cst_120 = arith.constant 1.000000e+00 : f32
    %209 = vector.broadcast %cst_120 : f32 to vector<8x32xf32>
    %210 = arith.addf %209, %208 : vector<8x32xf32>
    %211 = arith.divf %209, %210 : vector<8x32xf32>
    %212 = arith.addf %193, %202 : vector<8x32xf32>
    %213 = arith.negf %212 : vector<8x32xf32>
    %214 = math.exp %213 : vector<8x32xf32>
    %cst_121 = arith.constant 1.000000e+00 : f32
    %215 = vector.broadcast %cst_121 : f32 to vector<8x32xf32>
    %216 = arith.addf %215, %214 : vector<8x32xf32>
    %217 = arith.divf %215, %216 : vector<8x32xf32>
    %218 = arith.mulf %211, %205 : vector<8x32xf32>
    %219 = arith.addf %196, %218 : vector<8x32xf32>
    %220 = math.tanh %219 : vector<8x32xf32>
    %cst_122 = arith.constant 1.000000e+00 : f32
    %221 = vector.broadcast %cst_122 : f32 to vector<8x32xf32>
    %222 = arith.subf %221, %217 : vector<8x32xf32>
    %223 = arith.mulf %222, %220 : vector<8x32xf32>
    %224 = arith.mulf %217, %183 : vector<8x32xf32>
    %225 = arith.addf %223, %224 : vector<8x32xf32>
    %c5_i32 = arith.constant 5 : i32
    %c2_i32_123 = arith.constant 2 : i32
    %226 = arith.muli %c2_i32_123, %c5_i32 : i32
    %c7_i32_124 = arith.constant 7 : i32
    %227 = arith.subi %c7_i32_124, %226 : i32
    %228 = arith.muli %arg0, %227 : i32
    %229 = arith.addi %c5_i32, %228 : i32
    %c0_125 = arith.constant 0 : index
    %c0_126 = arith.constant 0 : index
    %230 = arith.index_cast %229 : i32 to index
    %c0_127 = arith.constant 0 : index
    %c0_128 = arith.constant 0 : index
    %231 = vector.load %arg2[%c0_125, %c0_126, %230, %c0_127, %c0_128] : memref<1x3x8x8x32xf32, #tpu.memory_space<vmem>>, vector<1x1x1x8x32xf32>
    %232 = vector.shape_cast %231 : vector<1x1x1x8x32xf32> to vector<8x32xf32>
    %c0_129 = arith.constant 0 : index
    %c1_130 = arith.constant 1 : index
    %233 = arith.index_cast %229 : i32 to index
    %c0_131 = arith.constant 0 : index
    %c0_132 = arith.constant 0 : index
    %234 = vector.load %arg2[%c0_129, %c1_130, %233, %c0_131, %c0_132] : memref<1x3x8x8x32xf32, #tpu.memory_space<vmem>>, vector<1x1x1x8x32xf32>
    %235 = vector.shape_cast %234 : vector<1x1x1x8x32xf32> to vector<8x32xf32>
    %c0_133 = arith.constant 0 : index
    %c2_134 = arith.constant 2 : index
    %236 = arith.index_cast %229 : i32 to index
    %c0_135 = arith.constant 0 : index
    %c0_136 = arith.constant 0 : index
    %237 = vector.load %arg2[%c0_133, %c2_134, %236, %c0_135, %c0_136] : memref<1x3x8x8x32xf32, #tpu.memory_space<vmem>>, vector<1x1x1x8x32xf32>
    %238 = vector.shape_cast %237 : vector<1x1x1x8x32xf32> to vector<8x32xf32>
    %cst_137 = arith.constant dense<0.000000e+00> : vector<8x32xf32>
    %239 = tpu.matmul %225, %4, %cst_137 {dimension_numbers = #tpu.dot_dimension_numbers<[1], [0], [0], [1], [0, 0, 1, 1], [], []>} : vector<8x32xf32>, vector<32x32xf32>, vector<8x32xf32> -> vector<8x32xf32>
    %240 = vector.broadcast %10 : vector<1x32xf32> to vector<8x32xf32>
    %241 = arith.addf %239, %240 : vector<8x32xf32>
    %cst_138 = arith.constant dense<0.000000e+00> : vector<8x32xf32>
    %242 = tpu.matmul %225, %6, %cst_138 {dimension_numbers = #tpu.dot_dimension_numbers<[1], [0], [0], [1], [0, 0, 1, 1], [], []>} : vector<8x32xf32>, vector<32x32xf32>, vector<8x32xf32> -> vector<8x32xf32>
    %243 = vector.broadcast %12 : vector<1x32xf32> to vector<8x32xf32>
    %244 = arith.addf %242, %243 : vector<8x32xf32>
    %cst_139 = arith.constant dense<0.000000e+00> : vector<8x32xf32>
    %245 = tpu.matmul %225, %8, %cst_139 {dimension_numbers = #tpu.dot_dimension_numbers<[1], [0], [0], [1], [0, 0, 1, 1], [], []>} : vector<8x32xf32>, vector<32x32xf32>, vector<8x32xf32> -> vector<8x32xf32>
    %246 = vector.broadcast %14 : vector<1x32xf32> to vector<8x32xf32>
    %247 = arith.addf %245, %246 : vector<8x32xf32>
    %248 = arith.addf %232, %241 : vector<8x32xf32>
    %249 = arith.negf %248 : vector<8x32xf32>
    %250 = math.exp %249 : vector<8x32xf32>
    %cst_140 = arith.constant 1.000000e+00 : f32
    %251 = vector.broadcast %cst_140 : f32 to vector<8x32xf32>
    %252 = arith.addf %251, %250 : vector<8x32xf32>
    %253 = arith.divf %251, %252 : vector<8x32xf32>
    %254 = arith.addf %235, %244 : vector<8x32xf32>
    %255 = arith.negf %254 : vector<8x32xf32>
    %256 = math.exp %255 : vector<8x32xf32>
    %cst_141 = arith.constant 1.000000e+00 : f32
    %257 = vector.broadcast %cst_141 : f32 to vector<8x32xf32>
    %258 = arith.addf %257, %256 : vector<8x32xf32>
    %259 = arith.divf %257, %258 : vector<8x32xf32>
    %260 = arith.mulf %253, %247 : vector<8x32xf32>
    %261 = arith.addf %238, %260 : vector<8x32xf32>
    %262 = math.tanh %261 : vector<8x32xf32>
    %cst_142 = arith.constant 1.000000e+00 : f32
    %263 = vector.broadcast %cst_142 : f32 to vector<8x32xf32>
    %264 = arith.subf %263, %259 : vector<8x32xf32>
    %265 = arith.mulf %264, %262 : vector<8x32xf32>
    %266 = arith.mulf %259, %225 : vector<8x32xf32>
    %267 = arith.addf %265, %266 : vector<8x32xf32>
    %c6_i32 = arith.constant 6 : i32
    %c2_i32_143 = arith.constant 2 : i32
    %268 = arith.muli %c2_i32_143, %c6_i32 : i32
    %c7_i32_144 = arith.constant 7 : i32
    %269 = arith.subi %c7_i32_144, %268 : i32
    %270 = arith.muli %arg0, %269 : i32
    %271 = arith.addi %c6_i32, %270 : i32
    %c0_145 = arith.constant 0 : index
    %c0_146 = arith.constant 0 : index
    %272 = arith.index_cast %271 : i32 to index
    %c0_147 = arith.constant 0 : index
    %c0_148 = arith.constant 0 : index
    %273 = vector.load %arg2[%c0_145, %c0_146, %272, %c0_147, %c0_148] : memref<1x3x8x8x32xf32, #tpu.memory_space<vmem>>, vector<1x1x1x8x32xf32>
    %274 = vector.shape_cast %273 : vector<1x1x1x8x32xf32> to vector<8x32xf32>
    %c0_149 = arith.constant 0 : index
    %c1_150 = arith.constant 1 : index
    %275 = arith.index_cast %271 : i32 to index
    %c0_151 = arith.constant 0 : index
    %c0_152 = arith.constant 0 : index
    %276 = vector.load %arg2[%c0_149, %c1_150, %275, %c0_151, %c0_152] : memref<1x3x8x8x32xf32, #tpu.memory_space<vmem>>, vector<1x1x1x8x32xf32>
    %277 = vector.shape_cast %276 : vector<1x1x1x8x32xf32> to vector<8x32xf32>
    %c0_153 = arith.constant 0 : index
    %c2_154 = arith.constant 2 : index
    %278 = arith.index_cast %271 : i32 to index
    %c0_155 = arith.constant 0 : index
    %c0_156 = arith.constant 0 : index
    %279 = vector.load %arg2[%c0_153, %c2_154, %278, %c0_155, %c0_156] : memref<1x3x8x8x32xf32, #tpu.memory_space<vmem>>, vector<1x1x1x8x32xf32>
    %280 = vector.shape_cast %279 : vector<1x1x1x8x32xf32> to vector<8x32xf32>
    %cst_157 = arith.constant dense<0.000000e+00> : vector<8x32xf32>
    %281 = tpu.matmul %267, %4, %cst_157 {dimension_numbers = #tpu.dot_dimension_numbers<[1], [0], [0], [1], [0, 0, 1, 1], [], []>} : vector<8x32xf32>, vector<32x32xf32>, vector<8x32xf32> -> vector<8x32xf32>
    %282 = vector.broadcast %10 : vector<1x32xf32> to vector<8x32xf32>
    %283 = arith.addf %281, %282 : vector<8x32xf32>
    %cst_158 = arith.constant dense<0.000000e+00> : vector<8x32xf32>
    %284 = tpu.matmul %267, %6, %cst_158 {dimension_numbers = #tpu.dot_dimension_numbers<[1], [0], [0], [1], [0, 0, 1, 1], [], []>} : vector<8x32xf32>, vector<32x32xf32>, vector<8x32xf32> -> vector<8x32xf32>
    %285 = vector.broadcast %12 : vector<1x32xf32> to vector<8x32xf32>
    %286 = arith.addf %284, %285 : vector<8x32xf32>
    %cst_159 = arith.constant dense<0.000000e+00> : vector<8x32xf32>
    %287 = tpu.matmul %267, %8, %cst_159 {dimension_numbers = #tpu.dot_dimension_numbers<[1], [0], [0], [1], [0, 0, 1, 1], [], []>} : vector<8x32xf32>, vector<32x32xf32>, vector<8x32xf32> -> vector<8x32xf32>
    %288 = vector.broadcast %14 : vector<1x32xf32> to vector<8x32xf32>
    %289 = arith.addf %287, %288 : vector<8x32xf32>
    %290 = arith.addf %274, %283 : vector<8x32xf32>
    %291 = arith.negf %290 : vector<8x32xf32>
    %292 = math.exp %291 : vector<8x32xf32>
    %cst_160 = arith.constant 1.000000e+00 : f32
    %293 = vector.broadcast %cst_160 : f32 to vector<8x32xf32>
    %294 = arith.addf %293, %292 : vector<8x32xf32>
    %295 = arith.divf %293, %294 : vector<8x32xf32>
    %296 = arith.addf %277, %286 : vector<8x32xf32>
    %297 = arith.negf %296 : vector<8x32xf32>
    %298 = math.exp %297 : vector<8x32xf32>
    %cst_161 = arith.constant 1.000000e+00 : f32
    %299 = vector.broadcast %cst_161 : f32 to vector<8x32xf32>
    %300 = arith.addf %299, %298 : vector<8x32xf32>
    %301 = arith.divf %299, %300 : vector<8x32xf32>
    %302 = arith.mulf %295, %289 : vector<8x32xf32>
    %303 = arith.addf %280, %302 : vector<8x32xf32>
    %304 = math.tanh %303 : vector<8x32xf32>
    %cst_162 = arith.constant 1.000000e+00 : f32
    %305 = vector.broadcast %cst_162 : f32 to vector<8x32xf32>
    %306 = arith.subf %305, %301 : vector<8x32xf32>
    %307 = arith.mulf %306, %304 : vector<8x32xf32>
    %308 = arith.mulf %301, %267 : vector<8x32xf32>
    %309 = arith.addf %307, %308 : vector<8x32xf32>
    %c7_i32_163 = arith.constant 7 : i32
    %c2_i32_164 = arith.constant 2 : i32
    %310 = arith.muli %c2_i32_164, %c7_i32_163 : i32
    %c7_i32_165 = arith.constant 7 : i32
    %311 = arith.subi %c7_i32_165, %310 : i32
    %312 = arith.muli %arg0, %311 : i32
    %313 = arith.addi %c7_i32_163, %312 : i32
    %c0_166 = arith.constant 0 : index
    %c0_167 = arith.constant 0 : index
    %314 = arith.index_cast %313 : i32 to index
    %c0_168 = arith.constant 0 : index
    %c0_169 = arith.constant 0 : index
    %315 = vector.load %arg2[%c0_166, %c0_167, %314, %c0_168, %c0_169] : memref<1x3x8x8x32xf32, #tpu.memory_space<vmem>>, vector<1x1x1x8x32xf32>
    %316 = vector.shape_cast %315 : vector<1x1x1x8x32xf32> to vector<8x32xf32>
    %c0_170 = arith.constant 0 : index
    %c1_171 = arith.constant 1 : index
    %317 = arith.index_cast %313 : i32 to index
    %c0_172 = arith.constant 0 : index
    %c0_173 = arith.constant 0 : index
    %318 = vector.load %arg2[%c0_170, %c1_171, %317, %c0_172, %c0_173] : memref<1x3x8x8x32xf32, #tpu.memory_space<vmem>>, vector<1x1x1x8x32xf32>
    %319 = vector.shape_cast %318 : vector<1x1x1x8x32xf32> to vector<8x32xf32>
    %c0_174 = arith.constant 0 : index
    %c2_175 = arith.constant 2 : index
    %320 = arith.index_cast %313 : i32 to index
    %c0_176 = arith.constant 0 : index
    %c0_177 = arith.constant 0 : index
    %321 = vector.load %arg2[%c0_174, %c2_175, %320, %c0_176, %c0_177] : memref<1x3x8x8x32xf32, #tpu.memory_space<vmem>>, vector<1x1x1x8x32xf32>
    %322 = vector.shape_cast %321 : vector<1x1x1x8x32xf32> to vector<8x32xf32>
    %cst_178 = arith.constant dense<0.000000e+00> : vector<8x32xf32>
    %323 = tpu.matmul %309, %4, %cst_178 {dimension_numbers = #tpu.dot_dimension_numbers<[1], [0], [0], [1], [0, 0, 1, 1], [], []>} : vector<8x32xf32>, vector<32x32xf32>, vector<8x32xf32> -> vector<8x32xf32>
    %324 = vector.broadcast %10 : vector<1x32xf32> to vector<8x32xf32>
    %325 = arith.addf %323, %324 : vector<8x32xf32>
    %cst_179 = arith.constant dense<0.000000e+00> : vector<8x32xf32>
    %326 = tpu.matmul %309, %6, %cst_179 {dimension_numbers = #tpu.dot_dimension_numbers<[1], [0], [0], [1], [0, 0, 1, 1], [], []>} : vector<8x32xf32>, vector<32x32xf32>, vector<8x32xf32> -> vector<8x32xf32>
    %327 = vector.broadcast %12 : vector<1x32xf32> to vector<8x32xf32>
    %328 = arith.addf %326, %327 : vector<8x32xf32>
    %cst_180 = arith.constant dense<0.000000e+00> : vector<8x32xf32>
    %329 = tpu.matmul %309, %8, %cst_180 {dimension_numbers = #tpu.dot_dimension_numbers<[1], [0], [0], [1], [0, 0, 1, 1], [], []>} : vector<8x32xf32>, vector<32x32xf32>, vector<8x32xf32> -> vector<8x32xf32>
    %330 = vector.broadcast %14 : vector<1x32xf32> to vector<8x32xf32>
    %331 = arith.addf %329, %330 : vector<8x32xf32>
    %332 = arith.addf %316, %325 : vector<8x32xf32>
    %333 = arith.negf %332 : vector<8x32xf32>
    %334 = math.exp %333 : vector<8x32xf32>
    %cst_181 = arith.constant 1.000000e+00 : f32
    %335 = vector.broadcast %cst_181 : f32 to vector<8x32xf32>
    %336 = arith.addf %335, %334 : vector<8x32xf32>
    %337 = arith.divf %335, %336 : vector<8x32xf32>
    %338 = arith.addf %319, %328 : vector<8x32xf32>
    %339 = arith.negf %338 : vector<8x32xf32>
    %340 = math.exp %339 : vector<8x32xf32>
    %cst_182 = arith.constant 1.000000e+00 : f32
    %341 = vector.broadcast %cst_182 : f32 to vector<8x32xf32>
    %342 = arith.addf %341, %340 : vector<8x32xf32>
    %343 = arith.divf %341, %342 : vector<8x32xf32>
    %344 = arith.mulf %337, %331 : vector<8x32xf32>
    %345 = arith.addf %322, %344 : vector<8x32xf32>
    %346 = math.tanh %345 : vector<8x32xf32>
    %cst_183 = arith.constant 1.000000e+00 : f32
    %347 = vector.broadcast %cst_183 : f32 to vector<8x32xf32>
    %348 = arith.subf %347, %343 : vector<8x32xf32>
    %349 = arith.mulf %348, %346 : vector<8x32xf32>
    %350 = arith.mulf %343, %309 : vector<8x32xf32>
    %351 = arith.addf %349, %350 : vector<8x32xf32>
    %c8_i32 = arith.constant 8 : i32
    %c0_184 = arith.constant 0 : index
    %c0_185 = arith.constant 0 : index
    %352 = vector.load %arg6[%c0_184, %c0_185] : memref<8x32xf32, #tpu.memory_space<vmem>>, vector<8x32xf32>
    tpu.vector_store %arg6[%c0_184, %c0_185], %351 {strides = array<i32>} : memref<8x32xf32, #tpu.memory_space<vmem>>, vector<8x32xf32>,
    %c0_i32_186 = arith.constant 0 : i32
    %353 = arith.cmpi eq, %arg1, %c0_i32_186 : i32
    %354 = arith.extui %353 : i1 to i32
    %c0_i32_187 = arith.constant 0 : i32
    %355 = arith.cmpi ne, %354, %c0_i32_187 : i32
    scf.if %355 {
      %c0_188 = arith.constant 0 : index
      %c0_189 = arith.constant 0 : index
      %c0_190 = arith.constant 0 : index
      %356 = vector.load %arg5[%c0_188, %c0_189, %c0_190] : memref<1x8x32xf32, #tpu.memory_space<vmem>>, vector<1x8x32xf32>
      %357 = vector.shape_cast %356 : vector<1x8x32xf32> to vector<8x32xf32>
      %358 = vector.shape_cast %351 : vector<8x32xf32> to vector<1x8x32xf32>
      tpu.vector_store %arg5[%c0_188, %c0_189, %c0_190], %358 {strides = array<i32>} : memref<1x8x32xf32, #tpu.memory_space<vmem>>, vector<1x8x32xf32>,
    } else {
    }
    return
  }
  func.func @transform_0(%arg0: i32, %arg1: i32) -> (i32, i32, i32, i32, i32) {
    %c2_i32 = arith.constant 2 : i32
    %0 = arith.muli %c2_i32, %arg1 : i32
    %c0_i32 = arith.constant 0 : i32
    %1 = arith.subi %c0_i32, %0 : i32
    %2 = arith.muli %arg0, %1 : i32
    %3 = arith.addi %arg1, %2 : i32
    %c0_i32_0 = arith.constant 0 : i32
    %c0_i32_1 = arith.constant 0 : i32
    %c0_i32_2 = arith.constant 0 : i32
    %c0_i32_3 = arith.constant 0 : i32
    return %arg0, %c0_i32_0, %3, %c0_i32_1, %c0_i32_2 : i32, i32, i32, i32, i32
  }
  func.func @transform_1(%arg0: i32, %arg1: i32) -> (i32, i32, i32, i32) {
    %c0_i32 = arith.constant 0 : i32
    %c0_i32_0 = arith.constant 0 : i32
    %c0_i32_1 = arith.constant 0 : i32
    %c0_i32_2 = arith.constant 0 : i32
    return %arg0, %c0_i32, %c0_i32_0, %c0_i32_1 : i32, i32, i32, i32
  }
  func.func @transform_2(%arg0: i32, %arg1: i32) -> (i32, i32, i32, i32) {
    %c0_i32 = arith.constant 0 : i32
    %c0_i32_0 = arith.constant 0 : i32
    %c0_i32_1 = arith.constant 0 : i32
    %c0_i32_2 = arith.constant 0 : i32
    return %arg0, %c0_i32, %c0_i32_0, %c0_i32_1 : i32, i32, i32, i32
  }
  func.func @transform_3(%arg0: i32, %arg1: i32) -> (i32, i32, i32) {
    %c0_i32 = arith.constant 0 : i32
    %c0_i32_0 = arith.constant 0 : i32
    %c0_i32_1 = arith.constant 0 : i32
    return %arg0, %c0_i32, %c0_i32_0 : i32, i32, i32
  }
}

</mosaic_0001>

<llo_original>
// kernel: tpu_custom_call.1
$region0: #{tpu_custom_call.1}
  #allocation0 [shape = 'u32[]', space=smem, size = 0x4, offset = 0x4, fixed_abs, tag = 'smem constant byte address 0x4 - core index']
  #allocation1 [shape = 'u32[144,128]{1,0:T(1,128)}', space=vmem, size = 0x12000, scoped, tag = 'internal scratch']
  #allocation2 [shape = 'f32[8,32]{1,0:T(8,128)}', space=vmem, size = 0x1000, scoped, tag = 'scratch operand']
  %s0 = inlined_call_operand.hbm [shape: f32[1,3,8,8,32], index: 0, kind: input, shape index: {}]
  %s1 = inlined_call_operand.hbm [shape: f32[1,3,32,32], index: 1, kind: input, shape index: {}]
  %s2 = inlined_call_operand.vmem [shape: f32[1,3,1,32], index: 2, kind: input, shape index: {}]
  %s3 = inlined_call_operand.hbm [shape: f32[1,8,32], index: 3, kind: output, shape index: {}]
  %s4 = sld [smem:[#allocation0]]
  $region38: #{tpu_custom_call.1} parent=0
    _
  %s6 = ssub.s32 1, %s4
  %s7 = scalar_select 0, %s6, %s4
  $region1: #{tpu_custom_call.1} parent=0
    #allocation3 [shape = 'u8[98304]{0}', space=vmem, size = 0x18000, scoped, tag = 'input window, operand 0, single buffered']
    #allocation4 [shape = 's32[1]{0}', space=sflag, size = 0x4, scoped, tag = 'scoped memory for tpu_custom_call.1']
    #allocation5 [shape = 's32[1]{0}', space=sflag, size = 0x4, scoped, tag = 'scoped memory for tpu_custom_call.1']
    #allocation6 [shape = 'u8[49152]{0}', space=vmem, size = 0xc000, scoped, tag = 'input window, operand 1, single buffered']
    #allocation7 [shape = 's32[1]{0}', space=sflag, size = 0x4, scoped, tag = 'scoped memory for tpu_custom_call.1']
    #allocation8 [shape = 'u8[4096]{0}', space=vmem, size = 0x1000, scoped, tag = 'output window, operand 0, single buffered']
    %8 = vsyncpa [#allocation4], 0
    %9 = vsyncpa [#allocation7], 0
    %10 = vsyncpa [#allocation5], 0
    // Predicated region
    $region2: #{tpu_custom_call.1} parent=1 // pred_check
      _
    $region3: #{tpu_custom_call.1} parent=1 // pred_check_branch
      %12 = sbr.rel (0) target = $region5
    $region4: #{tpu_custom_call.1} parent=1 // pred_region
      %s13 = smul.u32 0, 2
      %s14 = ssub.s32 0, %s13
      %s15 = smul.u32 0, %s14
      %s16 = sadd.s32 0, %s15
      %s17 = smul.u32 8, %s16
      %s19 = ssub.s32 3072, 3072
      %20 = vsyncadd [#allocation4], %s19
      %s21 = smul.addr %s17, 128
      %s22 = scalar_lea.hbm %s0, %s21
      %s23 = sshll.u32 [#allocation3], 4
      %s24 = int_to_ptr.vmem [resolvable:$true] %s23
      %29 = dma.hbm_to_vmem [thread:$0]  %s22, 3072, %s24, [#allocation4], 128, 128, 8
    $region5: #{tpu_custom_call.1} parent=1 // pred_fallthru
      _
    // Predicated region
    $region6: #{tpu_custom_call.1} parent=1 // pred_check
      _
    $region7: #{tpu_custom_call.1} parent=1 // pred_check_branch
      %31 = sbr.rel (0) target = $region9
    $region8: #{tpu_custom_call.1} parent=1 // pred_region
      %s33 = ssub.s32 1536, 1536
      %34 = vsyncadd [#allocation7], %s33
      %s35 = sshll.u32 [#allocation6], 4
      %s36 = int_to_ptr.vmem [resolvable:$true] %s35
      %41 = dma.hbm_to_vmem [thread:$0]  %s1, 1536, %s36, [#allocation7], 128, 128, 8
    $region9: #{tpu_custom_call.1} parent=1 // pred_fallthru
      _
    // Predicated region
    $region10: #{tpu_custom_call.1} parent=1 // pred_check
      _
    $region11: #{tpu_custom_call.1} parent=1 // pred_check_branch
      %43 = sbr.rel (0) target = $region13
    $region12: #{tpu_custom_call.1} parent=1 // pred_region
      _
    $region13: #{tpu_custom_call.1} parent=1 // pred_fallthru
      _
    // Predicated region
    $region14: #{tpu_custom_call.1} parent=1 // pred_check
      _
    $region15: #{tpu_custom_call.1} parent=1 // pred_check_branch
      %45 = sbr.rel (0) target = $region17
    $region16: #{tpu_custom_call.1} parent=1 // pred_region
      %46 = dma.done [#allocation4], 3072
    $region17: #{tpu_custom_call.1} parent=1 // pred_fallthru
      _
    // Predicated region
    $region18: #{tpu_custom_call.1} parent=1 // pred_check
      _
    $region19: #{tpu_custom_call.1} parent=1 // pred_check_branch
      %48 = sbr.rel (0) target = $region21
    $region20: #{tpu_custom_call.1} parent=1 // pred_region
      %49 = dma.done [#allocation7], 1536
    $region21: #{tpu_custom_call.1} parent=1 // pred_fallthru
      _
    %s50 = smul.u32 0, 2
    %s51 = ssub.s32 0, %s50
    %s52 = smul.u32 0, %s51
    %s53 = sadd.s32 0, %s52
    %s54 = smul.u32 8, %s53
    %p55 = scmp.eq.s32.totalorder 0, 0
    // Predicated region
    $region22: #{tpu_custom_call.1} parent=1 // pred_check
      %p56 = pneg %p55
    $region23: #{tpu_custom_call.1} parent=1 // pred_check_branch
      %58 = sbr.rel (%p56) target = $region25
    $region24: #{tpu_custom_call.1} parent=1 // pred_region
      %vm59 = vcmask 261120
      %60 = vst.msk [vmem:[#allocation2] sm:$0xff] %vm59, 0.0
    $region25: #{tpu_custom_call.1} parent=1 // pred_fallthru
      _
    %v61 = vld [vmem:[#allocation6] sm:$0xff]
    %v62 = vld [vmem:[#allocation6 + $0x8] sm:$0xff]
    %v63 = vld [vmem:[#allocation6 + $0x10] sm:$0xff]
    %v64 = vld [vmem:[#allocation6 + $0x18] sm:$0xff]
    %s65 = scalar_lea.vmem [#allocation6], 32
    %v66 = vld [vmem:[%s65] sm:$0xff]
    %v67 = vld [vmem:[%s65 + $0x8] sm:$0xff]
    %v68 = vld [vmem:[%s65 + $0x10] sm:$0xff]
    %v69 = vld [vmem:[%s65 + $0x18] sm:$0xff]
    %s70 = scalar_lea.vmem [#allocation6], 64
    %v71 = vld [vmem:[%s70] sm:$0xff]
    %v72 = vld [vmem:[%s70 + $0x8] sm:$0xff]
    %v73 = vld [vmem:[%s70 + $0x10] sm:$0xff]
    %v74 = vld [vmem:[%s70 + $0x18] sm:$0xff]
    %v75 = vld [vmem:[%s2] sm:$0x1]
    %s76 = scalar_lea.vmem %s2, 1
    %v77 = vld [vmem:[%s76] sm:$0x1]
    %s78 = scalar_lea.vmem %s2, 2
    %v79 = vld [vmem:[%s78] sm:$0x1]
    %v80 = vld [vmem:[#allocation2] sm:$0xff]
    %s81 = smul.u32 0, 7
    %s82 = smul.u32 %s81, 8
    %s83 = scalar_lea.vmem [#allocation3], %s82
    %v84 = vld [vmem:[%s83] sm:$0xff]
    %s85 = sadd.s32 %s82, 64
    %s86 = scalar_lea.vmem [#allocation3], %s85
    %v87 = vld [vmem:[%s86] sm:$0xff]
    %s88 = sadd.s32 %s82, 128
    %s89 = scalar_lea.vmem [#allocation3], %s88
    %v90 = vld [vmem:[%s89] sm:$0xff]
    %v92 = vlaneseq
    %v93 = vshrl.u32 %v92, 7
    %v94 = vsub.s32 0, %v93
    %v95 = vrot.slane %v75, %v94
    %vm97 = vcmask 261120
    %v99 = vsel %vm97, %v80, 0
    %101 = vmatprep.subr.mxu0 0.0
    %102 = vmatpush1.msra.mxu0 %v61
    %103 = vmatprep.subr.mxu0 0.0
    %104 = vmatpush1.msra.mxu0 %v62
    %105 = vmatprep.subr.mxu0 0.0
    %106 = vmatpush1.msra.mxu0 %v63
    %107 = vmatprep.subr.mxu0 0.0
    %108 = vmatpush1.msra.mxu0 %v64
    %109 = vmatprep.subr.mxu0 0.0
    %110 = vmatpush1.msra.mxu0 0.0
    %111 = vmatprep.subr.mxu0 0.0
    %112 = vmatpush1.msra.mxu0 0.0
    %113 = vmatprep.subr.mxu0 0.0
    %114 = vmatpush1.msra.mxu0 0.0
    %115 = vmatprep.subr.mxu0 0.0
    %116 = vmatpush1.msra.mxu0 0.0
    %117 = vmatprep.subr.mxu0 0.0
    %118 = vmatpush1.msra.mxu0 0.0
    %119 = vmatprep.subr.mxu0 0.0
    %120 = vmatpush1.msra.mxu0 0.0
    %121 = vmatprep.subr.mxu0 0.0
    %122 = vmatpush1.msra.mxu0 0.0
    %123 = vmatprep.subr.mxu0 0.0
    %124 = vmatpush1.msra.mxu0 0.0
    %125 = vmatprep.subr.mxu0 0.0
    %126 = vmatpush1.msra.mxu0 0.0
    %127 = vmatprep.subr.mxu0 0.0
    %128 = vmatpush1.msra.mxu0 0.0
    %129 = vmatprep.subr.mxu0 0.0
    %130 = vmatpush1.msra.mxu0 0.0
    %131 = vmatprep.subr.mxu0 0.0
    %132 = vmatpush1.msra.mxu0 0.0
    %133 = vmatprep.subr.mxu0 0.0
    %134 = vmatpush1.msra.mxu0 0.0
    %135 = vmatprep.subr.mxu0 0.0
    %136 = vmatpush1.msra.mxu0 0.0
    %137 = vmatprep.subr.mxu0 0.0
    %138 = vmatpush1.msra.mxu0 0.0
    %139 = vmatprep.subr.mxu0 0.0
    %140 = vmatpush1.msra.mxu0 0.0
    %141 = vmatprep.subr.mxu0 0.0
    %142 = vmatpush1.msra.mxu0 0.0
    %143 = vmatprep.subr.mxu0 0.0
    %144 = vmatpush1.msra.mxu0 0.0
    %145 = vmatprep.subr.mxu0 0.0
    %146 = vmatpush1.msra.mxu0 0.0
    %147 = vmatprep.subr.mxu0 0.0
    %148 = vmatpush1.msra.mxu0 0.0
    %149 = vmatprep.subr.mxu0 0.0
    %150 = vmatpush1.msra.mxu0 0.0
    %151 = vmatprep.subr.mxu0 0.0
    %152 = vmatpush1.msra.mxu0 0.0
    %153 = vmatprep.subr.mxu0 0.0
    %154 = vmatpush1.msra.mxu0 0.0
    %155 = vmatprep.subr.mxu0 0.0
    %156 = vmatpush1.msra.mxu0 0.0
    %157 = vmatprep.subr.mxu0 0.0
    %158 = vmatpush1.msra.mxu0 0.0
    %159 = vmatprep.subr.mxu0 0.0
    %160 = vmatpush1.msra.mxu0 0.0
    %161 = vmatprep.subr.mxu0 0.0
    %162 = vmatpush1.msra.mxu0 0.0
    %163 = vmatprep.subr.mxu0 0.0
    %164 = vmatpush1.msra.mxu0 0.0
    %165 = vmatprep.mubr.f32.mxu0 0.0
    %166 = vmatmul.mubr.f32.gmra.mrb[0].mxu0 %v99
    %v167 = vpop.f32.mrb[0].mxu0
    %v168 = vadd.f32 %v95, %v167
    %v169 = vpop.f32.mrb[0].mxu0
    %170 = vdwg.mxu0
    %v172 = vlaneseq
    %v173 = vshrl.u32 %v172, 7
    %v174 = vsub.s32 0, %v173
    %v175 = vrot.slane %v77, %v174
    %177 = vmatprep.subr.mxu0 0.0
    %178 = vmatpush1.msra.mxu0 %v66
    %179 = vmatprep.subr.mxu0 0.0
    %180 = vmatpush1.msra.mxu0 %v67
    %181 = vmatprep.subr.mxu0 0.0
    %182 = vmatpush1.msra.mxu0 %v68
    %183 = vmatprep.subr.mxu0 0.0
    %184 = vmatpush1.msra.mxu0 %v69
    %185 = vmatprep.subr.mxu0 0.0
    %186 = vmatpush1.msra.mxu0 0.0
    %187 = vmatprep.subr.mxu0 0.0
    %188 = vmatpush1.msra.mxu0 0.0
    %189 = vmatprep.subr.mxu0 0.0
    %190 = vmatpush1.msra.mxu0 0.0
    %191 = vmatprep.subr.mxu0 0.0
    %192 = vmatpush1.msra.mxu0 0.0
    %193 = vmatprep.subr.mxu0 0.0
    %194 = vmatpush1.msra.mxu0 0.0
    %195 = vmatprep.subr.mxu0 0.0
    %196 = vmatpush1.msra.mxu0 0.0
    %197 = vmatprep.subr.mxu0 0.0
    %198 = vmatpush1.msra.mxu0 0.0
    %199 = vmatprep.subr.mxu0 0.0
    %200 = vmatpush1.msra.mxu0 0.0
    %201 = vmatprep.subr.mxu0 0.0
    %202 = vmatpush1.msra.mxu0 0.0
    %203 = vmatprep.subr.mxu0 0.0
    %204 = vmatpush1.msra.mxu0 0.0
    %205 = vmatprep.subr.mxu0 0.0
    %206 = vmatpush1.msra.mxu0 0.0
    %207 = vmatprep.subr.mxu0 0.0
    %208 = vmatpush1.msra.mxu0 0.0
    %209 = vmatprep.subr.mxu0 0.0
    %210 = vmatpush1.msra.mxu0 0.0
    %211 = vmatprep.subr.mxu0 0.0
    %212 = vmatpush1.msra.mxu0 0.0
    %213 = vmatprep.subr.mxu0 0.0
    %214 = vmatpush1.msra.mxu0 0.0
    %215 = vmatprep.subr.mxu0 0.0
    %216 = vmatpush1.msra.mxu0 0.0
    %217 = vmatprep.subr.mxu0 0.0
    %218 = vmatpush1.msra.mxu0 0.0
    %219 = vmatprep.subr.mxu0 0.0
    %220 = vmatpush1.msra.mxu0 0.0
    %221 = vmatprep.subr.mxu0 0.0
    %222 = vmatpush1.msra.mxu0 0.0
    %223 = vmatprep.subr.mxu0 0.0
    %224 = vmatpush1.msra.mxu0 0.0
    %225 = vmatprep.subr.mxu0 0.0
    %226 = vmatpush1.msra.mxu0 0.0
    %227 = vmatprep.subr.mxu0 0.0
    %228 = vmatpush1.msra.mxu0 0.0
    %229 = vmatprep.subr.mxu0 0.0
    %230 = vmatpush1.msra.mxu0 0.0
    %231 = vmatprep.subr.mxu0 0.0
    %232 = vmatpush1.msra.mxu0 0.0
    %233 = vmatprep.subr.mxu0 0.0
    %234 = vmatpush1.msra.mxu0 0.0
    %235 = vmatprep.subr.mxu0 0.0
    %236 = vmatpush1.msra.mxu0 0.0
    %237 = vmatprep.subr.mxu0 0.0
    %238 = vmatpush1.msra.mxu0 0.0
    %239 = vmatprep.subr.mxu0 0.0
    %240 = vmatpush1.msra.mxu0 0.0
    %241 = vmatprep.mubr.f32.mxu0 0.0
    %242 = vmatmul.mubr.f32.gmra.mrb[0].mxu0 %v99
    %v243 = vpop.f32.mrb[0].mxu0
    %v244 = vadd.f32 %v175, %v243
    %v245 = vpop.f32.mrb[0].mxu0
    %246 = vdwg.mxu0
    %v248 = vlaneseq
    %v249 = vshrl.u32 %v248, 7
    %v250 = vsub.s32 0, %v249
    %v251 = vrot.slane %v79, %v250
    %253 = vmatprep.subr.mxu0 0.0
    %254 = vmatpush1.msra.mxu0 %v71
    %255 = vmatprep.subr.mxu0 0.0
    %256 = vmatpush1.msra.mxu0 %v72
    %257 = vmatprep.subr.mxu0 0.0
    %258 = vmatpush1.msra.mxu0 %v73
    %259 = vmatprep.subr.mxu0 0.0
    %260 = vmatpush1.msra.mxu0 %v74
    %261 = vmatprep.subr.mxu0 0.0
    %262 = vmatpush1.msra.mxu0 0.0
    %263 = vmatprep.subr.mxu0 0.0
    %264 = vmatpush1.msra.mxu0 0.0
    %265 = vmatprep.subr.mxu0 0.0
    %266 = vmatpush1.msra.mxu0 0.0
    %267 = vmatprep.subr.mxu0 0.0
    %268 = vmatpush1.msra.mxu0 0.0
    %269 = vmatprep.subr.mxu0 0.0
    %270 = vmatpush1.msra.mxu0 0.0
    %271 = vmatprep.subr.mxu0 0.0
    %272 = vmatpush1.msra.mxu0 0.0
    %273 = vmatprep.subr.mxu0 0.0
    %274 = vmatpush1.msra.mxu0 0.0
    %275 = vmatprep.subr.mxu0 0.0
    %276 = vmatpush1.msra.mxu0 0.0
    %277 = vmatprep.subr.mxu0 0.0
    %278 = vmatpush1.msra.mxu0 0.0
    %279 = vmatprep.subr.mxu0 0.0
    %280 = vmatpush1.msra.mxu0 0.0
    %281 = vmatprep.subr.mxu0 0.0
    %282 = vmatpush1.msra.mxu0 0.0
    %283 = vmatprep.subr.mxu0 0.0
    %284 = vmatpush1.msra.mxu0 0.0
    %285 = vmatprep.subr.mxu0 0.0
    %286 = vmatpush1.msra.mxu0 0.0
    %287 = vmatprep.subr.mxu0 0.0
    %288 = vmatpush1.msra.mxu0 0.0
    %289 = vmatprep.subr.mxu0 0.0
    %290 = vmatpush1.msra.mxu0 0.0
    %291 = vmatprep.subr.mxu0 0.0
    %292 = vmatpush1.msra.mxu0 0.0
    %293 = vmatprep.subr.mxu0 0.0
    %294 = vmatpush1.msra.mxu0 0.0
    %295 = vmatprep.subr.mxu0 0.0
    %296 = vmatpush1.msra.mxu0 0.0
    %297 = vmatprep.subr.mxu0 0.0
    %298 = vmatpush1.msra.mxu0 0.0
    %299 = vmatprep.subr.mxu0 0.0
    %300 = vmatpush1.msra.mxu0 0.0
    %301 = vmatprep.subr.mxu0 0.0
    %302 = vmatpush1.msra.mxu0 0.0
    %303 = vmatprep.subr.mxu0 0.0
    %304 = vmatpush1.msra.mxu0 0.0
    %305 = vmatprep.subr.mxu0 0.0
    %306 = vmatpush1.msra.mxu0 0.0
    %307 = vmatprep.subr.mxu0 0.0
    %308 = vmatpush1.msra.mxu0 0.0
    %309 = vmatprep.subr.mxu0 0.0
    %310 = vmatpush1.msra.mxu0 0.0
    %311 = vmatprep.subr.mxu0 0.0
    %312 = vmatpush1.msra.mxu0 0.0
    %313 = vmatprep.subr.mxu0 0.0
    %314 = vmatpush1.msra.mxu0 0.0
    %315 = vmatprep.subr.mxu0 0.0
    %316 = vmatpush1.msra.mxu0 0.0
    %317 = vmatprep.mubr.f32.mxu0 0.0
    %318 = vmatmul.mubr.f32.gmra.mrb[0].mxu0 %v99
    %v319 = vpop.f32.mrb[0].mxu0
    %v320 = vadd.f32 %v251, %v319
    %v321 = vpop.f32.mrb[0].mxu0
    %322 = vdwg.mxu0
    %v323 = vadd.f32 %v84, %v168
    %v324 = vxor.u32 %v323, 2147483648
    %v325 = vmul.f32 %v324, 1.442695
    %v326 = vpow.pop %v325
    %v327 = vadd.f32 %v326, 1.0
    %v328 = vrcp.pop %v327
    %v329 = vmul.f32 1.0, %v328
    %v330 = vadd.f32 %v87, %v244
    %v331 = vxor.u32 %v330, 2147483648
    %v332 = vmul.f32 %v331, 1.442695
    %v333 = vpow.pop %v332
    %v334 = vadd.f32 %v333, 1.0
    %v335 = vrcp.pop %v334
    %v336 = vmul.f32 1.0, %v335
    %v337 = vmul.f32 %v329, %v320
    %v338 = vadd.f32 %v90, %v337
    %v339 = vtanh.pop %v338
    %v340 = vsub.f32 1.0, %v336
    %v341 = vmul.f32 %v340, %v339
    %v342 = vmul.f32 %v336, %v80
    %v343 = vadd.f32 %v341, %v342
    %s344 = smul.u32 0, 5
    %s345 = sadd.s32 %s344, 1
    %s346 = smul.u32 %s345, 8
    %s347 = scalar_lea.vmem [#allocation3], %s346
    %v348 = vld [vmem:[%s347] sm:$0xff]
    %s349 = sadd.s32 %s346, 64
    %s350 = scalar_lea.vmem [#allocation3], %s349
    %v351 = vld [vmem:[%s350] sm:$0xff]
    %s352 = sadd.s32 %s346, 128
    %s353 = scalar_lea.vmem [#allocation3], %s352
    %v354 = vld [vmem:[%s353] sm:$0xff]
    %v356 = vsel %vm97, %v343, 0
    %358 = vmatprep.subr.mxu0 0.0
    %359 = vmatpush1.msra.mxu0 %v61
    %360 = vmatprep.subr.mxu0 0.0
    %361 = vmatpush1.msra.mxu0 %v62
    %362 = vmatprep.subr.mxu0 0.0
    %363 = vmatpush1.msra.mxu0 %v63
    %364 = vmatprep.subr.mxu0 0.0
    %365 = vmatpush1.msra.mxu0 %v64
    %366 = vmatprep.subr.mxu0 0.0
    %367 = vmatpush1.msra.mxu0 0.0
    %368 = vmatprep.subr.mxu0 0.0
    %369 = vmatpush1.msra.mxu0 0.0
    %370 = vmatprep.subr.mxu0 0.0
    %371 = vmatpush1.msra.mxu0 0.0
    %372 = vmatprep.subr.mxu0 0.0
    %373 = vmatpush1.msra.mxu0 0.0
    %374 = vmatprep.subr.mxu0 0.0
    %375 = vmatpush1.msra.mxu0 0.0
    %376 = vmatprep.subr.mxu0 0.0
    %377 = vmatpush1.msra.mxu0 0.0
    %378 = vmatprep.subr.mxu0 0.0
    %379 = vmatpush1.msra.mxu0 0.0
    %380 = vmatprep.subr.mxu0 0.0
    %381 = vmatpush1.msra.mxu0 0.0
    %382 = vmatprep.subr.mxu0 0.0
    %383 = vmatpush1.msra.mxu0 0.0
    %384 = vmatprep.subr.mxu0 0.0
    %385 = vmatpush1.msra.mxu0 0.0
    %386 = vmatprep.subr.mxu0 0.0
    %387 = vmatpush1.msra.mxu0 0.0
    %388 = vmatprep.subr.mxu0 0.0
    %389 = vmatpush1.msra.mxu0 0.0
    %390 = vmatprep.subr.mxu0 0.0
    %391 = vmatpush1.msra.mxu0 0.0
    %392 = vmatprep.subr.mxu0 0.0
    %393 = vmatpush1.msra.mxu0 0.0
    %394 = vmatprep.subr.mxu0 0.0
    %395 = vmatpush1.msra.mxu0 0.0
    %396 = vmatprep.subr.mxu0 0.0
    %397 = vmatpush1.msra.mxu0 0.0
    %398 = vmatprep.subr.mxu0 0.0
    %399 = vmatpush1.msra.mxu0 0.0
    %400 = vmatprep.subr.mxu0 0.0
    %401 = vmatpush1.msra.mxu0 0.0
    %402 = vmatprep.subr.mxu0 0.0
    %403 = vmatpush1.msra.mxu0 0.0
    %404 = vmatprep.subr.mxu0 0.0
    %405 = vmatpush1.msra.mxu0 0.0
    %406 = vmatprep.subr.mxu0 0.0
    %407 = vmatpush1.msra.mxu0 0.0
    %408 = vmatprep.subr.mxu0 0.0
    %409 = vmatpush1.msra.mxu0 0.0
    %410 = vmatprep.subr.mxu0 0.0
    %411 = vmatpush1.msra.mxu0 0.0
    %412 = vmatprep.subr.mxu0 0.0
    %413 = vmatpush1.msra.mxu0 0.0
    %414 = vmatprep.subr.mxu0 0.0
    %415 = vmatpush1.msra.mxu0 0.0
    %416 = vmatprep.subr.mxu0 0.0
    %417 = vmatpush1.msra.mxu0 0.0
    %418 = vmatprep.subr.mxu0 0.0
    %419 = vmatpush1.msra.mxu0 0.0
    %420 = vmatprep.subr.mxu0 0.0
    %421 = vmatpush1.msra.mxu0 0.0
    %422 = vmatprep.mubr.f32.mxu0 0.0
    %423 = vmatmul.mubr.f32.gmra.mrb[0].mxu0 %v356
    %v424 = vpop.f32.mrb[0].mxu0
    %v425 = vadd.f32 %v95, %v424
    %v426 = vpop.f32.mrb[0].mxu0
    %427 = vdwg.mxu0
    %428 = vmatprep.subr.mxu0 0.0
    %429 = vmatpush1.msra.mxu0 %v66
    %430 = vmatprep.subr.mxu0 0.0
    %431 = vmatpush1.msra.mxu0 %v67
    %432 = vmatprep.subr.mxu0 0.0
    %433 = vmatpush1.msra.mxu0 %v68
    %434 = vmatprep.subr.mxu0 0.0
    %435 = vmatpush1.msra.mxu0 %v69
    %436 = vmatprep.subr.mxu0 0.0
    %437 = vmatpush1.msra.mxu0 0.0
    %438 = vmatprep.subr.mxu0 0.0
    %439 = vmatpush1.msra.mxu0 0.0
    %440 = vmatprep.subr.mxu0 0.0
    %441 = vmatpush1.msra.mxu0 0.0
    %442 = vmatprep.subr.mxu0 0.0
    %443 = vmatpush1.msra.mxu0 0.0
    %444 = vmatprep.subr.mxu0 0.0
    %445 = vmatpush1.msra.mxu0 0.0
    %446 = vmatprep.subr.mxu0 0.0
    %447 = vmatpush1.msra.mxu0 0.0
    %448 = vmatprep.subr.mxu0 0.0
    %449 = vmatpush1.msra.mxu0 0.0
    %450 = vmatprep.subr.mxu0 0.0
    %451 = vmatpush1.msra.mxu0 0.0
    %452 = vmatprep.subr.mxu0 0.0
    %453 = vmatpush1.msra.mxu0 0.0
    %454 = vmatprep.subr.mxu0 0.0
    %455 = vmatpush1.msra.mxu0 0.0
    %456 = vmatprep.subr.mxu0 0.0
    %457 = vmatpush1.msra.mxu0 0.0
    %458 = vmatprep.subr.mxu0 0.0
    %459 = vmatpush1.msra.mxu0 0.0
    %460 = vmatprep.subr.mxu0 0.0
    %461 = vmatpush1.msra.mxu0 0.0
    %462 = vmatprep.subr.mxu0 0.0
    %463 = vmatpush1.msra.mxu0 0.0
    %464 = vmatprep.subr.mxu0 0.0
    %465 = vmatpush1.msra.mxu0 0.0
    %466 = vmatprep.subr.mxu0 0.0
    %467 = vmatpush1.msra.mxu0 0.0
    %468 = vmatprep.subr.mxu0 0.0
    %469 = vmatpush1.msra.mxu0 0.0
    %470 = vmatprep.subr.mxu0 0.0
    %471 = vmatpush1.msra.mxu0 0.0
    %472 = vmatprep.subr.mxu0 0.0
    %473 = vmatpush1.msra.mxu0 0.0
    %474 = vmatprep.subr.mxu0 0.0
    %475 = vmatpush1.msra.mxu0 0.0
    %476 = vmatprep.subr.mxu0 0.0
    %477 = vmatpush1.msra.mxu0 0.0
    %478 = vmatprep.subr.mxu0 0.0
    %479 = vmatpush1.msra.mxu0 0.0
    %480 = vmatprep.subr.mxu0 0.0
    %481 = vmatpush1.msra.mxu0 0.0
    %482 = vmatprep.subr.mxu0 0.0
    %483 = vmatpush1.msra.mxu0 0.0
    %484 = vmatprep.subr.mxu0 0.0
    %485 = vmatpush1.msra.mxu0 0.0
    %486 = vmatprep.subr.mxu0 0.0
    %487 = vmatpush1.msra.mxu0 0.0
    %488 = vmatprep.subr.mxu0 0.0
    %489 = vmatpush1.msra.mxu0 0.0
    %490 = vmatprep.subr.mxu0 0.0
    %491 = vmatpush1.msra.mxu0 0.0
    %492 = vmatprep.mubr.f32.mxu0 0.0
    %493 = vmatmul.mubr.f32.gmra.mrb[0].mxu0 %v356
    %v494 = vpop.f32.mrb[0].mxu0
    %v495 = vadd.f32 %v175, %v494
    %v496 = vpop.f32.mrb[0].mxu0
    %497 = vdwg.mxu0
    %498 = vmatprep.subr.mxu0 0.0
    %499 = vmatpush1.msra.mxu0 %v71
    %500 = vmatprep.subr.mxu0 0.0
    %501 = vmatpush1.msra.mxu0 %v72
    %502 = vmatprep.subr.mxu0 0.0
    %503 = vmatpush1.msra.mxu0 %v73
    %504 = vmatprep.subr.mxu0 0.0
    %505 = vmatpush1.msra.mxu0 %v74
    %506 = vmatprep.subr.mxu0 0.0
    %507 = vmatpush1.msra.mxu0 0.0
    %508 = vmatprep.subr.mxu0 0.0
    %509 = vmatpush1.msra.mxu0 0.0
    %510 = vmatprep.subr.mxu0 0.0
    %511 = vmatpush1.msra.mxu0 0.0
    %512 = vmatprep.subr.mxu0 0.0
    %513 = vmatpush1.msra.mxu0 0.0
    %514 = vmatprep.subr.mxu0 0.0
    %515 = vmatpush1.msra.mxu0 0.0
    %516 = vmatprep.subr.mxu0 0.0
    %517 = vmatpush1.msra.mxu0 0.0
    %518 = vmatprep.subr.mxu0 0.0
    %519 = vmatpush1.msra.mxu0 0.0
    %520 = vmatprep.subr.mxu0 0.0
    %521 = vmatpush1.msra.mxu0 0.0
    %522 = vmatprep.subr.mxu0 0.0
    %523 = vmatpush1.msra.mxu0 0.0
    %524 = vmatprep.subr.mxu0 0.0
    %525 = vmatpush1.msra.mxu0 0.0
    %526 = vmatprep.subr.mxu0 0.0
    %527 = vmatpush1.msra.mxu0 0.0
    %528 = vmatprep.subr.mxu0 0.0
    %529 = vmatpush1.msra.mxu0 0.0
    %530 = vmatprep.subr.mxu0 0.0
    %531 = vmatpush1.msra.mxu0 0.0
    %532 = vmatprep.subr.mxu0 0.0
    %533 = vmatpush1.msra.mxu0 0.0
    %534 = vmatprep.subr.mxu0 0.0
    %535 = vmatpush1.msra.mxu0 0.0
    %536 = vmatprep.subr.mxu0 0.0
    %537 = vmatpush1.msra.mxu0 0.0
    %538 = vmatprep.subr.mxu0 0.0
    %539 = vmatpush1.msra.mxu0 0.0
    %540 = vmatprep.subr.mxu0 0.0
    %541 = vmatpush1.msra.mxu0 0.0
    %542 = vmatprep.subr.mxu0 0.0
    %543 = vmatpush1.msra.mxu0 0.0
    %544 = vmatprep.subr.mxu0 0.0
    %545 = vmatpush1.msra.mxu0 0.0
    %546 = vmatprep.subr.mxu0 0.0
    %547 = vmatpush1.msra.mxu0 0.0
    %548 = vmatprep.subr.mxu0 0.0
    %549 = vmatpush1.msra.mxu0 0.0
    %550 = vmatprep.subr.mxu0 0.0
    %551 = vmatpush1.msra.mxu0 0.0
    %552 = vmatprep.subr.mxu0 0.0
    %553 = vmatpush1.msra.mxu0 0.0
    %554 = vmatprep.subr.mxu0 0.0
    %555 = vmatpush1.msra.mxu0 0.0
    %556 = vmatprep.subr.mxu0 0.0
    %557 = vmatpush1.msra.mxu0 0.0
    %558 = vmatprep.subr.mxu0 0.0
    %559 = vmatpush1.msra.mxu0 0.0
    %560 = vmatprep.subr.mxu0 0.0
    %561 = vmatpush1.msra.mxu0 0.0
    %562 = vmatprep.mubr.f32.mxu0 0.0
    %563 = vmatmul.mubr.f32.gmra.mrb[0].mxu0 %v356
    %v564 = vpop.f32.mrb[0].mxu0
    %v565 = vadd.f32 %v251, %v564
    %v566 = vpop.f32.mrb[0].mxu0
    %567 = vdwg.mxu0
    %v568 = vadd.f32 %v348, %v425
    %v569 = vxor.u32 %v568, 2147483648
    %v570 = vmul.f32 %v569, 1.442695
    %v571 = vpow.pop %v570
    %v572 = vadd.f32 %v571, 1.0
    %v573 = vrcp.pop %v572
    %v574 = vmul.f32 1.0, %v573
    %v575 = vadd.f32 %v351, %v495
    %v576 = vxor.u32 %v575, 2147483648
    %v577 = vmul.f32 %v576, 1.442695
    %v578 = vpow.pop %v577
    %v579 = vadd.f32 %v578, 1.0
    %v580 = vrcp.pop %v579
    %v581 = vmul.f32 1.0, %v580
    %v582 = vmul.f32 %v574, %v565
    %v583 = vadd.f32 %v354, %v582
    %v584 = vtanh.pop %v583
    %v585 = vsub.f32 1.0, %v581
    %v586 = vmul.f32 %v585, %v584
    %v587 = vmul.f32 %v581, %v343
    %v588 = vadd.f32 %v586, %v587
    %s589 = smul.u32 0, 3
    %s590 = sadd.s32 %s589, 2
    %s591 = smul.u32 %s590, 8
    %s592 = scalar_lea.vmem [#allocation3], %s591
    %v593 = vld [vmem:[%s592] sm:$0xff]
    %s594 = sadd.s32 %s591, 64
    %s595 = scalar_lea.vmem [#allocation3], %s594
    %v596 = vld [vmem:[%s595] sm:$0xff]
    %s597 = sadd.s32 %s591, 128
    %s598 = scalar_lea.vmem [#allocation3], %s597
    %v599 = vld [vmem:[%s598] sm:$0xff]
    %v601 = vsel %vm97, %v588, 0
    %603 = vmatprep.subr.mxu0 0.0
    %604 = vmatpush1.msra.mxu0 %v61
    %605 = vmatprep.subr.mxu0 0.0
    %606 = vmatpush1.msra.mxu0 %v62
    %607 = vmatprep.subr.mxu0 0.0
    %608 = vmatpush1.msra.mxu0 %v63
    %609 = vmatprep.subr.mxu0 0.0
    %610 = vmatpush1.msra.mxu0 %v64
    %611 = vmatprep.subr.mxu0 0.0
    %612 = vmatpush1.msra.mxu0 0.0
    %613 = vmatprep.subr.mxu0 0.0
    %614 = vmatpush1.msra.mxu0 0.0
    %615 = vmatprep.subr.mxu0 0.0
    %616 = vmatpush1.msra.mxu0 0.0
    %617 = vmatprep.subr.mxu0 0.0
    %618 = vmatpush1.msra.mxu0 0.0
    %619 = vmatprep.subr.mxu0 0.0
    %620 = vmatpush1.msra.mxu0 0.0
    %621 = vmatprep.subr.mxu0 0.0
    %622 = vmatpush1.msra.mxu0 0.0
    %623 = vmatprep.subr.mxu0 0.0
    %624 = vmatpush1.msra.mxu0 0.0
    %625 = vmatprep.subr.mxu0 0.0
    %626 = vmatpush1.msra.mxu0 0.0
    %627 = vmatprep.subr.mxu0 0.0
    %628 = vmatpush1.msra.mxu0 0.0
    %629 = vmatprep.subr.mxu0 0.0
    %630 = vmatpush1.msra.mxu0 0.0
    %631 = vmatprep.subr.mxu0 0.0
    %632 = vmatpush1.msra.mxu0 0.0
    %633 = vmatprep.subr.mxu0 0.0
    %634 = vmatpush1.msra.mxu0 0.0
    %635 = vmatprep.subr.mxu0 0.0
    %636 = vmatpush1.msra.mxu0 0.0
    %637 = vmatprep.subr.mxu0 0.0
    %638 = vmatpush1.msra.mxu0 0.0
    %639 = vmatprep.subr.mxu0 0.0
    %640 = vmatpush1.msra.mxu0 0.0
    %641 = vmatprep.subr.mxu0 0.0
    %642 = vmatpush1.msra.mxu0 0.0
    %643 = vmatprep.subr.mxu0 0.0
    %644 = vmatpush1.msra.mxu0 0.0
    %645 = vmatprep.subr.mxu0 0.0
    %646 = vmatpush1.msra.mxu0 0.0
    %647 = vmatprep.subr.mxu0 0.0
    %648 = vmatpush1.msra.mxu0 0.0
    %649 = vmatprep.subr.mxu0 0.0
    %650 = vmatpush1.msra.mxu0 0.0
    %651 = vmatprep.subr.mxu0 0.0
    %652 = vmatpush1.msra.mxu0 0.0
    %653 = vmatprep.subr.mxu0 0.0
    %654 = vmatpush1.msra.mxu0 0.0
    %655 = vmatprep.subr.mxu0 0.0
    %656 = vmatpush1.msra.mxu0 0.0
    %657 = vmatprep.subr.mxu0 0.0
    %658 = vmatpush1.msra.mxu0 0.0
    %659 = vmatprep.subr.mxu0 0.0
    %660 = vmatpush1.msra.mxu0 0.0
    %661 = vmatprep.subr.mxu0 0.0
    %662 = vmatpush1.msra.mxu0 0.0
    %663 = vmatprep.subr.mxu0 0.0
    %664 = vmatpush1.msra.mxu0 0.0
    %665 = vmatprep.subr.mxu0 0.0
    %666 = vmatpush1.msra.mxu0 0.0
    %667 = vmatprep.mubr.f32.mxu0 0.0
    %668 = vmatmul.mubr.f32.gmra.mrb[0].mxu0 %v601
    %v669 = vpop.f32.mrb[0].mxu0
    %v670 = vadd.f32 %v95, %v669
    %v671 = vpop.f32.mrb[0].mxu0
    %672 = vdwg.mxu0
    %673 = vmatprep.subr.mxu0 0.0
    %674 = vmatpush1.msra.mxu0 %v66
    %675 = vmatprep.subr.mxu0 0.0
    %676 = vmatpush1.msra.mxu0 %v67
    %677 = vmatprep.subr.mxu0 0.0
    %678 = vmatpush1.msra.mxu0 %v68
    %679 = vmatprep.subr.mxu0 0.0
    %680 = vmatpush1.msra.mxu0 %v69
    %681 = vmatprep.subr.mxu0 0.0
    %682 = vmatpush1.msra.mxu0 0.0
    %683 = vmatprep.subr.mxu0 0.0
    %684 = vmatpush1.msra.mxu0 0.0
    %685 = vmatprep.subr.mxu0 0.0
    %686 = vmatpush1.msra.mxu0 0.0
    %687 = vmatprep.subr.mxu0 0.0
    %688 = vmatpush1.msra.mxu0 0.0
    %689 = vmatprep.subr.mxu0 0.0
    %690 = vmatpush1.msra.mxu0 0.0
    %691 = vmatprep.subr.mxu0 0.0
    %692 = vmatpush1.msra.mxu0 0.0
    %693 = vmatprep.subr.mxu0 0.0
    %694 = vmatpush1.msra.mxu0 0.0
    %695 = vmatprep.subr.mxu0 0.0
    %696 = vmatpush1.msra.mxu0 0.0
    %697 = vmatprep.subr.mxu0 0.0
    %698 = vmatpush1.msra.mxu0 0.0
    %699 = vmatprep.subr.mxu0 0.0
    %700 = vmatpush1.msra.mxu0 0.0
    %701 = vmatprep.subr.mxu0 0.0
    %702 = vmatpush1.msra.mxu0 0.0
    %703 = vmatprep.subr.mxu0 0.0
    %704 = vmatpush1.msra.mxu0 0.0
    %705 = vmatprep.subr.mxu0 0.0
    %706 = vmatpush1.msra.mxu0 0.0
    %707 = vmatprep.subr.mxu0 0.0
    %708 = vmatpush1.msra.mxu0 0.0
    %709 = vmatprep.subr.mxu0 0.0
    %710 = vmatpush1.msra.mxu0 0.0
    %711 = vmatprep.subr.mxu0 0.0
    %712 = vmatpush1.msra.mxu0 0.0
    %713 = vmatprep.subr.mxu0 0.0
    %714 = vmatpush1.msra.mxu0 0.0
    %715 = vmatprep.subr.mxu0 0.0
    %716 = vmatpush1.msra.mxu0 0.0
    %717 = vmatprep.subr.mxu0 0.0
    %718 = vmatpush1.msra.mxu0 0.0
    %719 = vmatprep.subr.mxu0 0.0
    %720 = vmatpush1.msra.mxu0 0.0
    %721 = vmatprep.subr.mxu0 0.0
    %722 = vmatpush1.msra.mxu0 0.0
    %723 = vmatprep.subr.mxu0 0.0
    %724 = vmatpush1.msra.mxu0 0.0
    %725 = vmatprep.subr.mxu0 0.0
    %726 = vmatpush1.msra.mxu0 0.0
    %727 = vmatprep.subr.mxu0 0.0
    %728 = vmatpush1.msra.mxu0 0.0
    %729 = vmatprep.subr.mxu0 0.0
    %730 = vmatpush1.msra.mxu0 0.0
    %731 = vmatprep.subr.mxu0 0.0
    %732 = vmatpush1.msra.mxu0 0.0
    %733 = vmatprep.subr.mxu0 0.0
    %734 = vmatpush1.msra.mxu0 0.0
    %735 = vmatprep.subr.mxu0 0.0
    %736 = vmatpush1.msra.mxu0 0.0
    %737 = vmatprep.mubr.f32.mxu0 0.0
    %738 = vmatmul.mubr.f32.gmra.mrb[0].mxu0 %v601
    %v739 = vpop.f32.mrb[0].mxu0
    %v740 = vadd.f32 %v175, %v739
    %v741 = vpop.f32.mrb[0].mxu0
    %742 = vdwg.mxu0
    %743 = vmatprep.subr.mxu0 0.0
    %744 = vmatpush1.msra.mxu0 %v71
    %745 = vmatprep.subr.mxu0 0.0
    %746 = vmatpush1.msra.mxu0 %v72
    %747 = vmatprep.subr.mxu0 0.0
    %748 = vmatpush1.msra.mxu0 %v73
    %749 = vmatprep.subr.mxu0 0.0
    %750 = vmatpush1.msra.mxu0 %v74
    %751 = vmatprep.subr.mxu0 0.0
    %752 = vmatpush1.msra.mxu0 0.0
    %753 = vmatprep.subr.mxu0 0.0
    %754 = vmatpush1.msra.mxu0 0.0
    %755 = vmatprep.subr.mxu0 0.0
    %756 = vmatpush1.msra.mxu0 0.0
    %757 = vmatprep.subr.mxu0 0.0
    %758 = vmatpush1.msra.mxu0 0.0
    %759 = vmatprep.subr.mxu0 0.0
    %760 = vmatpush1.msra.mxu0 0.0
    %761 = vmatprep.subr.mxu0 0.0
    %762 = vmatpush1.msra.mxu0 0.0
    %763 = vmatprep.subr.mxu0 0.0
    %764 = vmatpush1.msra.mxu0 0.0
    %765 = vmatprep.subr.mxu0 0.0
    %766 = vmatpush1.msra.mxu0 0.0
    %767 = vmatprep.subr.mxu0 0.0
    %768 = vmatpush1.msra.mxu0 0.0
    %769 = vmatprep.subr.mxu0 0.0
    %770 = vmatpush1.msra.mxu0 0.0
    %771 = vmatprep.subr.mxu0 0.0
    %772 = vmatpush1.msra.mxu0 0.0
    %773 = vmatprep.subr.mxu0 0.0
    %774 = vmatpush1.msra.mxu0 0.0
    %775 = vmatprep.subr.mxu0 0.0
    %776 = vmatpush1.msra.mxu0 0.0
    %777 = vmatprep.subr.mxu0 0.0
    %778 = vmatpush1.msra.mxu0 0.0
    %779 = vmatprep.subr.mxu0 0.0
    %780 = vmatpush1.msra.mxu0 0.0
    %781 = vmatprep.subr.mxu0 0.0
    %782 = vmatpush1.msra.mxu0 0.0
    %783 = vmatprep.subr.mxu0 0.0
    %784 = vmatpush1.msra.mxu0 0.0
    %785 = vmatprep.subr.mxu0 0.0
    %786 = vmatpush1.msra.mxu0 0.0
    %787 = vmatprep.subr.mxu0 0.0
    %788 = vmatpush1.msra.mxu0 0.0
    %789 = vmatprep.subr.mxu0 0.0
    %790 = vmatpush1.msra.mxu0 0.0
    %791 = vmatprep.subr.mxu0 0.0
    %792 = vmatpush1.msra.mxu0 0.0
    %793 = vmatprep.subr.mxu0 0.0
    %794 = vmatpush1.msra.mxu0 0.0
    %795 = vmatprep.subr.mxu0 0.0
    %796 = vmatpush1.msra.mxu0 0.0
    %797 = vmatprep.subr.mxu0 0.0
    %798 = vmatpush1.msra.mxu0 0.0
    %799 = vmatprep.subr.mxu0 0.0
    %800 = vmatpush1.msra.mxu0 0.0
    %801 = vmatprep.subr.mxu0 0.0
    %802 = vmatpush1.msra.mxu0 0.0
    %803 = vmatprep.subr.mxu0 0.0
    %804 = vmatpush1.msra.mxu0 0.0
    %805 = vmatprep.subr.mxu0 0.0
    %806 = vmatpush1.msra.mxu0 0.0
    %807 = vmatprep.mubr.f32.mxu0 0.0
    %808 = vmatmul.mubr.f32.gmra.mrb[0].mxu0 %v601
    %v809 = vpop.f32.mrb[0].mxu0
    %v810 = vadd.f32 %v251, %v809
    %v811 = vpop.f32.mrb[0].mxu0
    %812 = vdwg.mxu0
    %v813 = vadd.f32 %v593, %v670
    %v814 = vxor.u32 %v813, 2147483648
    %v815 = vmul.f32 %v814, 1.442695
    %v816 = vpow.pop %v815
    %v817 = vadd.f32 %v816, 1.0
    %v818 = vrcp.pop %v817
    %v819 = vmul.f32 1.0, %v818
    %v820 = vadd.f32 %v596, %v740
    %v821 = vxor.u32 %v820, 2147483648
    %v822 = vmul.f32 %v821, 1.442695
    %v823 = vpow.pop %v822
    %v824 = vadd.f32 %v823, 1.0
    %v825 = vrcp.pop %v824
    %v826 = vmul.f32 1.0, %v825
    %v827 = vmul.f32 %v819, %v810
    %v828 = vadd.f32 %v599, %v827
    %v829 = vtanh.pop %v828
    %v830 = vsub.f32 1.0, %v826
    %v831 = vmul.f32 %v830, %v829
    %v832 = vmul.f32 %v826, %v588
    %v833 = vadd.f32 %v831, %v832
    %s834 = sadd.s32 0, 3
    %s835 = smul.u32 %s834, 8
    %s836 = scalar_lea.vmem [#allocation3], %s835
    %v837 = vld [vmem:[%s836] sm:$0xff]
    %s838 = sadd.s32 %s835, 64
    %s839 = scalar_lea.vmem [#allocation3], %s838
    %v840 = vld [vmem:[%s839] sm:$0xff]
    %s841 = sadd.s32 %s835, 128
    %s842 = scalar_lea.vmem [#allocation3], %s841
    %v843 = vld [vmem:[%s842] sm:$0xff]
    %v845 = vsel %vm97, %v833, 0
    %847 = vmatprep.subr.mxu0 0.0
    %848 = vmatpush1.msra.mxu0 %v61
    %849 = vmatprep.subr.mxu0 0.0
    %850 = vmatpush1.msra.mxu0 %v62
    %851 = vmatprep.subr.mxu0 0.0
    %852 = vmatpush1.msra.mxu0 %v63
    %853 = vmatprep.subr.mxu0 0.0
    %854 = vmatpush1.msra.mxu0 %v64
    %855 = vmatprep.subr.mxu0 0.0
    %856 = vmatpush1.msra.mxu0 0.0
    %857 = vmatprep.subr.mxu0 0.0
    %858 = vmatpush1.msra.mxu0 0.0
    %859 = vmatprep.subr.mxu0 0.0
    %860 = vmatpush1.msra.mxu0 0.0
    %861 = vmatprep.subr.mxu0 0.0
    %862 = vmatpush1.msra.mxu0 0.0
    %863 = vmatprep.subr.mxu0 0.0
    %864 = vmatpush1.msra.mxu0 0.0
    %865 = vmatprep.subr.mxu0 0.0
    %866 = vmatpush1.msra.mxu0 0.0
    %867 = vmatprep.subr.mxu0 0.0
    %868 = vmatpush1.msra.mxu0 0.0
    %869 = vmatprep.subr.mxu0 0.0
    %870 = vmatpush1.msra.mxu0 0.0
    %871 = vmatprep.subr.mxu0 0.0
    %872 = vmatpush1.msra.mxu0 0.0
    %873 = vmatprep.subr.mxu0 0.0
    %874 = vmatpush1.msra.mxu0 0.0
    %875 = vmatprep.subr.mxu0 0.0
    %876 = vmatpush1.msra.mxu0 0.0
    %877 = vmatprep.subr.mxu0 0.0
    %878 = vmatpush1.msra.mxu0 0.0
    %879 = vmatprep.subr.mxu0 0.0
    %880 = vmatpush1.msra.mxu0 0.0
    %881 = vmatprep.subr.mxu0 0.0
    %882 = vmatpush1.msra.mxu0 0.0
    %883 = vmatprep.subr.mxu0 0.0
    %884 = vmatpush1.msra.mxu0 0.0
    %885 = vmatprep.subr.mxu0 0.0
    %886 = vmatpush1.msra.mxu0 0.0
    %887 = vmatprep.subr.mxu0 0.0
    %888 = vmatpush1.msra.mxu0 0.0
    %889 = vmatprep.subr.mxu0 0.0
    %890 = vmatpush1.msra.mxu0 0.0
    %891 = vmatprep.subr.mxu0 0.0
    %892 = vmatpush1.msra.mxu0 0.0
    %893 = vmatprep.subr.mxu0 0.0
    %894 = vmatpush1.msra.mxu0 0.0
    %895 = vmatprep.subr.mxu0 0.0
    %896 = vmatpush1.msra.mxu0 0.0
    %897 = vmatprep.subr.mxu0 0.0
    %898 = vmatpush1.msra.mxu0 0.0
    %899 = vmatprep.subr.mxu0 0.0
    %900 = vmatpush1.msra.mxu0 0.0
    %901 = vmatprep.subr.mxu0 0.0
    %902 = vmatpush1.msra.mxu0 0.0
    %903 = vmatprep.subr.mxu0 0.0
    %904 = vmatpush1.msra.mxu0 0.0
    %905 = vmatprep.subr.mxu0 0.0
    %906 = vmatpush1.msra.mxu0 0.0
    %907 = vmatprep.subr.mxu0 0.0
    %908 = vmatpush1.msra.mxu0 0.0
    %909 = vmatprep.subr.mxu0 0.0
    %910 = vmatpush1.msra.mxu0 0.0
    %911 = vmatprep.mubr.f32.mxu0 0.0
    %912 = vmatmul.mubr.f32.gmra.mrb[0].mxu0 %v845
    %v913 = vpop.f32.mrb[0].mxu0
    %v914 = vadd.f32 %v95, %v913
    %v915 = vpop.f32.mrb[0].mxu0
    %916 = vdwg.mxu0
    %917 = vmatprep.subr.mxu0 0.0
    %918 = vmatpush1.msra.mxu0 %v66
    %919 = vmatprep.subr.mxu0 0.0
    %920 = vmatpush1.msra.mxu0 %v67
    %921 = vmatprep.subr.mxu0 0.0
    %922 = vmatpush1.msra.mxu0 %v68
    %923 = vmatprep.subr.mxu0 0.0
    %924 = vmatpush1.msra.mxu0 %v69
    %925 = vmatprep.subr.mxu0 0.0
    %926 = vmatpush1.msra.mxu0 0.0
    %927 = vmatprep.subr.mxu0 0.0
    %928 = vmatpush1.msra.mxu0 0.0
    %929 = vmatprep.subr.mxu0 0.0
    %930 = vmatpush1.msra.mxu0 0.0
    %931 = vmatprep.subr.mxu0 0.0
    %932 = vmatpush1.msra.mxu0 0.0
    %933 = vmatprep.subr.mxu0 0.0
    %934 = vmatpush1.msra.mxu0 0.0
    %935 = vmatprep.subr.mxu0 0.0
    %936 = vmatpush1.msra.mxu0 0.0
    %937 = vmatprep.subr.mxu0 0.0
    %938 = vmatpush1.msra.mxu0 0.0
    %939 = vmatprep.subr.mxu0 0.0
    %940 = vmatpush1.msra.mxu0 0.0
    %941 = vmatprep.subr.mxu0 0.0
    %942 = vmatpush1.msra.mxu0 0.0
    %943 = vmatprep.subr.mxu0 0.0
    %944 = vmatpush1.msra.mxu0 0.0
    %945 = vmatprep.subr.mxu0 0.0
    %946 = vmatpush1.msra.mxu0 0.0
    %947 = vmatprep.subr.mxu0 0.0
    %948 = vmatpush1.msra.mxu0 0.0
    %949 = vmatprep.subr.mxu0 0.0
    %950 = vmatpush1.msra.mxu0 0.0
    %951 = vmatprep.subr.mxu0 0.0
    %952 = vmatpush1.msra.mxu0 0.0
    %953 = vmatprep.subr.mxu0 0.0
    %954 = vmatpush1.msra.mxu0 0.0
    %955 = vmatprep.subr.mxu0 0.0
    %956 = vmatpush1.msra.mxu0 0.0
    %957 = vmatprep.subr.mxu0 0.0
    %958 = vmatpush1.msra.mxu0 0.0
    %959 = vmatprep.subr.mxu0 0.0
    %960 = vmatpush1.msra.mxu0 0.0
    %961 = vmatprep.subr.mxu0 0.0
    %962 = vmatpush1.msra.mxu0 0.0
    %963 = vmatprep.subr.mxu0 0.0
    %964 = vmatpush1.msra.mxu0 0.0
    %965 = vmatprep.subr.mxu0 0.0
    %966 = vmatpush1.msra.mxu0 0.0
    %967 = vmatprep.subr.mxu0 0.0
    %968 = vmatpush1.msra.mxu0 0.0
    %969 = vmatprep.subr.mxu0 0.0
    %970 = vmatpush1.msra.mxu0 0.0
    %971 = vmatprep.subr.mxu0 0.0
    %972 = vmatpush1.msra.mxu0 0.0
    %973 = vmatprep.subr.mxu0 0.0
    %974 = vmatpush1.msra.mxu0 0.0
    %975 = vmatprep.subr.mxu0 0.0
    %976 = vmatpush1.msra.mxu0 0.0
    %977 = vmatprep.subr.mxu0 0.0
    %978 = vmatpush1.msra.mxu0 0.0
    %979 = vmatprep.subr.mxu0 0.0
    %980 = vmatpush1.msra.mxu0 0.0
    %981 = vmatprep.mubr.f32.mxu0 0.0
    %982 = vmatmul.mubr.f32.gmra.mrb[0].mxu0 %v845
    %v983 = vpop.f32.mrb[0].mxu0
    %v984 = vadd.f32 %v175, %v983
    %v985 = vpop.f32.mrb[0].mxu0
    %986 = vdwg.mxu0
    %987 = vmatprep.subr.mxu0 0.0
    %988 = vmatpush1.msra.mxu0 %v71
    %989 = vmatprep.subr.mxu0 0.0
    %990 = vmatpush1.msra.mxu0 %v72
    %991 = vmatprep.subr.mxu0 0.0
    %992 = vmatpush1.msra.mxu0 %v73
    %993 = vmatprep.subr.mxu0 0.0
    %994 = vmatpush1.msra.mxu0 %v74
    %995 = vmatprep.subr.mxu0 0.0
    %996 = vmatpush1.msra.mxu0 0.0
    %997 = vmatprep.subr.mxu0 0.0
    %998 = vmatpush1.msra.mxu0 0.0
    %999 = vmatprep.subr.mxu0 0.0
    %1000 = vmatpush1.msra.mxu0 0.0
    %1001 = vmatprep.subr.mxu0 0.0
    %1002 = vmatpush1.msra.mxu0 0.0
    %1003 = vmatprep.subr.mxu0 0.0
    %1004 = vmatpush1.msra.mxu0 0.0
    %1005 = vmatprep.subr.mxu0 0.0
    %1006 = vmatpush1.msra.mxu0 0.0
    %1007 = vmatprep.subr.mxu0 0.0
    %1008 = vmatpush1.msra.mxu0 0.0
    %1009 = vmatprep.subr.mxu0 0.0
    %1010 = vmatpush1.msra.mxu0 0.0
    %1011 = vmatprep.subr.mxu0 0.0
    %1012 = vmatpush1.msra.mxu0 0.0
    %1013 = vmatprep.subr.mxu0 0.0
    %1014 = vmatpush1.msra.mxu0 0.0
    %1015 = vmatprep.subr.mxu0 0.0
    %1016 = vmatpush1.msra.mxu0 0.0
    %1017 = vmatprep.subr.mxu0 0.0
    %1018 = vmatpush1.msra.mxu0 0.0
    %1019 = vmatprep.subr.mxu0 0.0
    %1020 = vmatpush1.msra.mxu0 0.0
    %1021 = vmatprep.subr.mxu0 0.0
    %1022 = vmatpush1.msra.mxu0 0.0
    %1023 = vmatprep.subr.mxu0 0.0
    %1024 = vmatpush1.msra.mxu0 0.0
    %1025 = vmatprep.subr.mxu0 0.0
    %1026 = vmatpush1.msra.mxu0 0.0
    %1027 = vmatprep.subr.mxu0 0.0
    %1028 = vmatpush1.msra.mxu0 0.0
    %1029 = vmatprep.subr.mxu0 0.0
    %1030 = vmatpush1.msra.mxu0 0.0
    %1031 = vmatprep.subr.mxu0 0.0
    %1032 = vmatpush1.msra.mxu0 0.0
    %1033 = vmatprep.subr.mxu0 0.0
    %1034 = vmatpush1.msra.mxu0 0.0
    %1035 = vmatprep.subr.mxu0 0.0
    %1036 = vmatpush1.msra.mxu0 0.0
    %1037 = vmatprep.subr.mxu0 0.0
    %1038 = vmatpush1.msra.mxu0 0.0
    %1039 = vmatprep.subr.mxu0 0.0
    %1040 = vmatpush1.msra.mxu0 0.0
    %1041 = vmatprep.subr.mxu0 0.0
    %1042 = vmatpush1.msra.mxu0 0.0
    %1043 = vmatprep.subr.mxu0 0.0
    %1044 = vmatpush1.msra.mxu0 0.0
    %1045 = vmatprep.subr.mxu0 0.0
    %1046 = vmatpush1.msra.mxu0 0.0
    %1047 = vmatprep.subr.mxu0 0.0
    %1048 = vmatpush1.msra.mxu0 0.0
    %1049 = vmatprep.subr.mxu0 0.0
    %1050 = vmatpush1.msra.mxu0 0.0
    %1051 = vmatprep.mubr.f32.mxu0 0.0
    %1052 = vmatmul.mubr.f32.gmra.mrb[0].mxu0 %v845
    %v1053 = vpop.f32.mrb[0].mxu0
    %v1054 = vadd.f32 %v251, %v1053
    %v1055 = vpop.f32.mrb[0].mxu0
    %1056 = vdwg.mxu0
    %v1057 = vadd.f32 %v837, %v914
    %v1058 = vxor.u32 %v1057, 2147483648
    %v1059 = vmul.f32 %v1058, 1.442695
    %v1060 = vpow.pop %v1059
    %v1061 = vadd.f32 %v1060, 1.0
    %v1062 = vrcp.pop %v1061
    %v1063 = vmul.f32 1.0, %v1062
    %v1064 = vadd.f32 %v840, %v984
    %v1065 = vxor.u32 %v1064, 2147483648
    %v1066 = vmul.f32 %v1065, 1.442695
    %v1067 = vpow.pop %v1066
    %v1068 = vadd.f32 %v1067, 1.0
    %v1069 = vrcp.pop %v1068
    %v1070 = vmul.f32 1.0, %v1069
    %v1071 = vmul.f32 %v1063, %v1054
    %v1072 = vadd.f32 %v843, %v1071
    %v1073 = vtanh.pop %v1072
    %v1074 = vsub.f32 1.0, %v1070
    %v1075 = vmul.f32 %v1074, %v1073
    %v1076 = vmul.f32 %v1070, %v833
    %v1077 = vadd.f32 %v1075, %v1076
    %s1078 = ssub.s32 4, 0
    %s1079 = smul.u32 %s1078, 8
    %s1080 = scalar_lea.vmem [#allocation3], %s1079
    %v1081 = vld [vmem:[%s1080] sm:$0xff]
    %s1082 = sadd.s32 %s1079, 64
    %s1083 = scalar_lea.vmem [#allocation3], %s1082
    %v1084 = vld [vmem:[%s1083] sm:$0xff]
    %s1085 = sadd.s32 %s1079, 128
    %s1086 = scalar_lea.vmem [#allocation3], %s1085
    %v1087 = vld [vmem:[%s1086] sm:$0xff]
    %v1089 = vsel %vm97, %v1077, 0
    %1091 = vmatprep.subr.mxu0 0.0
    %1092 = vmatpush1.msra.mxu0 %v61
    %1093 = vmatprep.subr.mxu0 0.0
    %1094 = vmatpush1.msra.mxu0 %v62
    %1095 = vmatprep.subr.mxu0 0.0
    %1096 = vmatpush1.msra.mxu0 %v63
    %1097 = vmatprep.subr.mxu0 0.0
    %1098 = vmatpush1.msra.mxu0 %v64
    %1099 = vmatprep.subr.mxu0 0.0
    %1100 = vmatpush1.msra.mxu0 0.0
    %1101 = vmatprep.subr.mxu0 0.0
    %1102 = vmatpush1.msra.mxu0 0.0
    %1103 = vmatprep.subr.mxu0 0.0
    %1104 = vmatpush1.msra.mxu0 0.0
    %1105 = vmatprep.subr.mxu0 0.0
    %1106 = vmatpush1.msra.mxu0 0.0
    %1107 = vmatprep.subr.mxu0 0.0
    %1108 = vmatpush1.msra.mxu0 0.0
    %1109 = vmatprep.subr.mxu0 0.0
    %1110 = vmatpush1.msra.mxu0 0.0
    %1111 = vmatprep.subr.mxu0 0.0
    %1112 = vmatpush1.msra.mxu0 0.0
    %1113 = vmatprep.subr.mxu0 0.0
    %1114 = vmatpush1.msra.mxu0 0.0
    %1115 = vmatprep.subr.mxu0 0.0
    %1116 = vmatpush1.msra.mxu0 0.0
    %1117 = vmatprep.subr.mxu0 0.0
    %1118 = vmatpush1.msra.mxu0 0.0
    %1119 = vmatprep.subr.mxu0 0.0
    %1120 = vmatpush1.msra.mxu0 0.0
    %1121 = vmatprep.subr.mxu0 0.0
    %1122 = vmatpush1.msra.mxu0 0.0
    %1123 = vmatprep.subr.mxu0 0.0
    %1124 = vmatpush1.msra.mxu0 0.0
    %1125 = vmatprep.subr.mxu0 0.0
    %1126 = vmatpush1.msra.mxu0 0.0
    %1127 = vmatprep.subr.mxu0 0.0
    %1128 = vmatpush1.msra.mxu0 0.0
    %1129 = vmatprep.subr.mxu0 0.0
    %1130 = vmatpush1.msra.mxu0 0.0
    %1131 = vmatprep.subr.mxu0 0.0
    %1132 = vmatpush1.msra.mxu0 0.0
    %1133 = vmatprep.subr.mxu0 0.0
    %1134 = vmatpush1.msra.mxu0 0.0
    %1135 = vmatprep.subr.mxu0 0.0
    %1136 = vmatpush1.msra.mxu0 0.0
    %1137 = vmatprep.subr.mxu0 0.0
    %1138 = vmatpush1.msra.mxu0 0.0
    %1139 = vmatprep.subr.mxu0 0.0
    %1140 = vmatpush1.msra.mxu0 0.0
    %1141 = vmatprep.subr.mxu0 0.0
    %1142 = vmatpush1.msra.mxu0 0.0
    %1143 = vmatprep.subr.mxu0 0.0
    %1144 = vmatpush1.msra.mxu0 0.0
    %1145 = vmatprep.subr.mxu0 0.0
    %1146 = vmatpush1.msra.mxu0 0.0
    %1147 = vmatprep.subr.mxu0 0.0
    %1148 = vmatpush1.msra.mxu0 0.0
    %1149 = vmatprep.subr.mxu0 0.0
    %1150 = vmatpush1.msra.mxu0 0.0
    %1151 = vmatprep.subr.mxu0 0.0
    %1152 = vmatpush1.msra.mxu0 0.0
    %1153 = vmatprep.subr.mxu0 0.0
    %1154 = vmatpush1.msra.mxu0 0.0
    %1155 = vmatprep.mubr.f32.mxu0 0.0
    %1156 = vmatmul.mubr.f32.gmra.mrb[0].mxu0 %v1089
    %v1157 = vpop.f32.mrb[0].mxu0
    %v1158 = vadd.f32 %v95, %v1157
    %v1159 = vpop.f32.mrb[0].mxu0
    %1160 = vdwg.mxu0
    %1161 = vmatprep.subr.mxu0 0.0
    %1162 = vmatpush1.msra.mxu0 %v66
    %1163 = vmatprep.subr.mxu0 0.0
    %1164 = vmatpush1.msra.mxu0 %v67
    %1165 = vmatprep.subr.mxu0 0.0
    %1166 = vmatpush1.msra.mxu0 %v68
    %1167 = vmatprep.subr.mxu0 0.0
    %1168 = vmatpush1.msra.mxu0 %v69
    %1169 = vmatprep.subr.mxu0 0.0
    %1170 = vmatpush1.msra.mxu0 0.0
    %1171 = vmatprep.subr.mxu0 0.0
    %1172 = vmatpush1.msra.mxu0 0.0
    %1173 = vmatprep.subr.mxu0 0.0
    %1174 = vmatpush1.msra.mxu0 0.0
    %1175 = vmatprep.subr.mxu0 0.0
    %1176 = vmatpush1.msra.mxu0 0.0
    %1177 = vmatprep.subr.mxu0 0.0
    %1178 = vmatpush1.msra.mxu0 0.0
    %1179 = vmatprep.subr.mxu0 0.0
    %1180 = vmatpush1.msra.mxu0 0.0
    %1181 = vmatprep.subr.mxu0 0.0
    %1182 = vmatpush1.msra.mxu0 0.0
    %1183 = vmatprep.subr.mxu0 0.0
    %1184 = vmatpush1.msra.mxu0 0.0
    %1185 = vmatprep.subr.mxu0 0.0
    %1186 = vmatpush1.msra.mxu0 0.0
    %1187 = vmatprep.subr.mxu0 0.0
    %1188 = vmatpush1.msra.mxu0 0.0
    %1189 = vmatprep.subr.mxu0 0.0
    %1190 = vmatpush1.msra.mxu0 0.0
    %1191 = vmatprep.subr.mxu0 0.0
    %1192 = vmatpush1.msra.mxu0 0.0
    %1193 = vmatprep.subr.mxu0 0.0
    %1194 = vmatpush1.msra.mxu0 0.0
    %1195 = vmatprep.subr.mxu0 0.0
    %1196 = vmatpush1.msra.mxu0 0.0
    %1197 = vmatprep.subr.mxu0 0.0
    %1198 = vmatpush1.msra.mxu0 0.0
    %1199 = vmatprep.subr.mxu0 0.0
    %1200 = vmatpush1.msra.mxu0 0.0
    %1201 = vmatprep.subr.mxu0 0.0
    %1202 = vmatpush1.msra.mxu0 0.0
    %1203 = vmatprep.subr.mxu0 0.0
    %1204 = vmatpush1.msra.mxu0 0.0
    %1205 = vmatprep.subr.mxu0 0.0
    %1206 = vmatpush1.msra.mxu0 0.0
    %1207 = vmatprep.subr.mxu0 0.0
    %1208 = vmatpush1.msra.mxu0 0.0
    %1209 = vmatprep.subr.mxu0 0.0
    %1210 = vmatpush1.msra.mxu0 0.0
    %1211 = vmatprep.subr.mxu0 0.0
    %1212 = vmatpush1.msra.mxu0 0.0
    %1213 = vmatprep.subr.mxu0 0.0
    %1214 = vmatpush1.msra.mxu0 0.0
    %1215 = vmatprep.subr.mxu0 0.0
    %1216 = vmatpush1.msra.mxu0 0.0
    %1217 = vmatprep.subr.mxu0 0.0
    %1218 = vmatpush1.msra.mxu0 0.0
    %1219 = vmatprep.subr.mxu0 0.0
    %1220 = vmatpush1.msra.mxu0 0.0
    %1221 = vmatprep.subr.mxu0 0.0
    %1222 = vmatpush1.msra.mxu0 0.0
    %1223 = vmatprep.subr.mxu0 0.0
    %1224 = vmatpush1.msra.mxu0 0.0
    %1225 = vmatprep.mubr.f32.mxu0 0.0
    %1226 = vmatmul.mubr.f32.gmra.mrb[0].mxu0 %v1089
    %v1227 = vpop.f32.mrb[0].mxu0
    %v1228 = vadd.f32 %v175, %v1227
    %v1229 = vpop.f32.mrb[0].mxu0
    %1230 = vdwg.mxu0
    %1231 = vmatprep.subr.mxu0 0.0
    %1232 = vmatpush1.msra.mxu0 %v71
    %1233 = vmatprep.subr.mxu0 0.0
    %1234 = vmatpush1.msra.mxu0 %v72
    %1235 = vmatprep.subr.mxu0 0.0
    %1236 = vmatpush1.msra.mxu0 %v73
    %1237 = vmatprep.subr.mxu0 0.0
    %1238 = vmatpush1.msra.mxu0 %v74
    %1239 = vmatprep.subr.mxu0 0.0
    %1240 = vmatpush1.msra.mxu0 0.0
    %1241 = vmatprep.subr.mxu0 0.0
    %1242 = vmatpush1.msra.mxu0 0.0
    %1243 = vmatprep.subr.mxu0 0.0
    %1244 = vmatpush1.msra.mxu0 0.0
    %1245 = vmatprep.subr.mxu0 0.0
    %1246 = vmatpush1.msra.mxu0 0.0
    %1247 = vmatprep.subr.mxu0 0.0
    %1248 = vmatpush1.msra.mxu0 0.0
    %1249 = vmatprep.subr.mxu0 0.0
    %1250 = vmatpush1.msra.mxu0 0.0
    %1251 = vmatprep.subr.mxu0 0.0
    %1252 = vmatpush1.msra.mxu0 0.0
    %1253 = vmatprep.subr.mxu0 0.0
    %1254 = vmatpush1.msra.mxu0 0.0
    %1255 = vmatprep.subr.mxu0 0.0
    %1256 = vmatpush1.msra.mxu0 0.0
    %1257 = vmatprep.subr.mxu0 0.0
    %1258 = vmatpush1.msra.mxu0 0.0
    %1259 = vmatprep.subr.mxu0 0.0
    %1260 = vmatpush1.msra.mxu0 0.0
    %1261 = vmatprep.subr.mxu0 0.0
    %1262 = vmatpush1.msra.mxu0 0.0
    %1263 = vmatprep.subr.mxu0 0.0
    %1264 = vmatpush1.msra.mxu0 0.0
    %1265 = vmatprep.subr.mxu0 0.0
    %1266 = vmatpush1.msra.mxu0 0.0
    %1267 = vmatprep.subr.mxu0 0.0
    %1268 = vmatpush1.msra.mxu0 0.0
    %1269 = vmatprep.subr.mxu0 0.0
    %1270 = vmatpush1.msra.mxu0 0.0
    %1271 = vmatprep.subr.mxu0 0.0
    %1272 = vmatpush1.msra.mxu0 0.0
    %1273 = vmatprep.subr.mxu0 0.0
    %1274 = vmatpush1.msra.mxu0 0.0
    %1275 = vmatprep.subr.mxu0 0.0
    %1276 = vmatpush1.msra.mxu0 0.0
    %1277 = vmatprep.subr.mxu0 0.0
    %1278 = vmatpush1.msra.mxu0 0.0
    %1279 = vmatprep.subr.mxu0 0.0
    %1280 = vmatpush1.msra.mxu0 0.0
    %1281 = vmatprep.subr.mxu0 0.0
    %1282 = vmatpush1.msra.mxu0 0.0
    %1283 = vmatprep.subr.mxu0 0.0
    %1284 = vmatpush1.msra.mxu0 0.0
    %1285 = vmatprep.subr.mxu0 0.0
    %1286 = vmatpush1.msra.mxu0 0.0
    %1287 = vmatprep.subr.mxu0 0.0
    %1288 = vmatpush1.msra.mxu0 0.0
    %1289 = vmatprep.subr.mxu0 0.0
    %1290 = vmatpush1.msra.mxu0 0.0
    %1291 = vmatprep.subr.mxu0 0.0
    %1292 = vmatpush1.msra.mxu0 0.0
    %1293 = vmatprep.subr.mxu0 0.0
    %1294 = vmatpush1.msra.mxu0 0.0
    %1295 = vmatprep.mubr.f32.mxu0 0.0
    %1296 = vmatmul.mubr.f32.gmra.mrb[0].mxu0 %v1089
    %v1297 = vpop.f32.mrb[0].mxu0
    %v1298 = vadd.f32 %v251, %v1297
    %v1299 = vpop.f32.mrb[0].mxu0
    %1300 = vdwg.mxu0
    %v1301 = vadd.f32 %v1081, %v1158
    %v1302 = vxor.u32 %v1301, 2147483648
    %v1303 = vmul.f32 %v1302, 1.442695
    %v1304 = vpow.pop %v1303
    %v1305 = vadd.f32 %v1304, 1.0
    %v1306 = vrcp.pop %v1305
    %v1307 = vmul.f32 1.0, %v1306
    %v1308 = vadd.f32 %v1084, %v1228
    %v1309 = vxor.u32 %v1308, 2147483648
    %v1310 = vmul.f32 %v1309, 1.442695
    %v1311 = vpow.pop %v1310
    %v1312 = vadd.f32 %v1311, 1.0
    %v1313 = vrcp.pop %v1312
    %v1314 = vmul.f32 1.0, %v1313
    %v1315 = vmul.f32 %v1307, %v1298
    %v1316 = vadd.f32 %v1087, %v1315
    %v1317 = vtanh.pop %v1316
    %v1318 = vsub.f32 1.0, %v1314
    %v1319 = vmul.f32 %v1318, %v1317
    %v1320 = vmul.f32 %v1314, %v1077
    %v1321 = vadd.f32 %v1319, %v1320
    %s1322 = smul.u32 0, 4294967293
    %s1323 = sadd.s32 %s1322, 5
    %s1324 = smul.u32 %s1323, 8
    %s1325 = scalar_lea.vmem [#allocation3], %s1324
    %v1326 = vld [vmem:[%s1325] sm:$0xff]
    %s1327 = sadd.s32 %s1324, 64
    %s1328 = scalar_lea.vmem [#allocation3], %s1327
    %v1329 = vld [vmem:[%s1328] sm:$0xff]
    %s1330 = sadd.s32 %s1324, 128
    %s1331 = scalar_lea.vmem [#allocation3], %s1330
    %v1332 = vld [vmem:[%s1331] sm:$0xff]
    %v1334 = vsel %vm97, %v1321, 0
    %1336 = vmatprep.subr.mxu0 0.0
    %1337 = vmatpush1.msra.mxu0 %v61
    %1338 = vmatprep.subr.mxu0 0.0
    %1339 = vmatpush1.msra.mxu0 %v62
    %1340 = vmatprep.subr.mxu0 0.0
    %1341 = vmatpush1.msra.mxu0 %v63
    %1342 = vmatprep.subr.mxu0 0.0
    %1343 = vmatpush1.msra.mxu0 %v64
    %1344 = vmatprep.subr.mxu0 0.0
    %1345 = vmatpush1.msra.mxu0 0.0
    %1346 = vmatprep.subr.mxu0 0.0
    %1347 = vmatpush1.msra.mxu0 0.0
    %1348 = vmatprep.subr.mxu0 0.0
    %1349 = vmatpush1.msra.mxu0 0.0
    %1350 = vmatprep.subr.mxu0 0.0
    %1351 = vmatpush1.msra.mxu0 0.0
    %1352 = vmatprep.subr.mxu0 0.0
    %1353 = vmatpush1.msra.mxu0 0.0
    %1354 = vmatprep.subr.mxu0 0.0
    %1355 = vmatpush1.msra.mxu0 0.0
    %1356 = vmatprep.subr.mxu0 0.0
    %1357 = vmatpush1.msra.mxu0 0.0
    %1358 = vmatprep.subr.mxu0 0.0
    %1359 = vmatpush1.msra.mxu0 0.0
    %1360 = vmatprep.subr.mxu0 0.0
    %1361 = vmatpush1.msra.mxu0 0.0
    %1362 = vmatprep.subr.mxu0 0.0
    %1363 = vmatpush1.msra.mxu0 0.0
    %1364 = vmatprep.subr.mxu0 0.0
    %1365 = vmatpush1.msra.mxu0 0.0
    %1366 = vmatprep.subr.mxu0 0.0
    %1367 = vmatpush1.msra.mxu0 0.0
    %1368 = vmatprep.subr.mxu0 0.0
    %1369 = vmatpush1.msra.mxu0 0.0
    %1370 = vmatprep.subr.mxu0 0.0
    %1371 = vmatpush1.msra.mxu0 0.0
    %1372 = vmatprep.subr.mxu0 0.0
    %1373 = vmatpush1.msra.mxu0 0.0
    %1374 = vmatprep.subr.mxu0 0.0
    %1375 = vmatpush1.msra.mxu0 0.0
    %1376 = vmatprep.subr.mxu0 0.0
    %1377 = vmatpush1.msra.mxu0 0.0
    %1378 = vmatprep.subr.mxu0 0.0
    %1379 = vmatpush1.msra.mxu0 0.0
    %1380 = vmatprep.subr.mxu0 0.0
    %1381 = vmatpush1.msra.mxu0 0.0
    %1382 = vmatprep.subr.mxu0 0.0
    %1383 = vmatpush1.msra.mxu0 0.0
    %1384 = vmatprep.subr.mxu0 0.0
    %1385 = vmatpush1.msra.mxu0 0.0
    %1386 = vmatprep.subr.mxu0 0.0
    %1387 = vmatpush1.msra.mxu0 0.0
    %1388 = vmatprep.subr.mxu0 0.0
    %1389 = vmatpush1.msra.mxu0 0.0
    %1390 = vmatprep.subr.mxu0 0.0
    %1391 = vmatpush1.msra.mxu0 0.0
    %1392 = vmatprep.subr.mxu0 0.0
    %1393 = vmatpush1.msra.mxu0 0.0
    %1394 = vmatprep.subr.mxu0 0.0
    %1395 = vmatpush1.msra.mxu0 0.0
    %1396 = vmatprep.subr.mxu0 0.0
    %1397 = vmatpush1.msra.mxu0 0.0
    %1398 = vmatprep.subr.mxu0 0.0
    %1399 = vmatpush1.msra.mxu0 0.0
    %1400 = vmatprep.mubr.f32.mxu0 0.0
    %1401 = vmatmul.mubr.f32.gmra.mrb[0].mxu0 %v1334
    %v1402 = vpop.f32.mrb[0].mxu0
    %v1403 = vadd.f32 %v95, %v1402
    %v1404 = vpop.f32.mrb[0].mxu0
    %1405 = vdwg.mxu0
    %1406 = vmatprep.subr.mxu0 0.0
    %1407 = vmatpush1.msra.mxu0 %v66
    %1408 = vmatprep.subr.mxu0 0.0
    %1409 = vmatpush1.msra.mxu0 %v67
    %1410 = vmatprep.subr.mxu0 0.0
    %1411 = vmatpush1.msra.mxu0 %v68
    %1412 = vmatprep.subr.mxu0 0.0
    %1413 = vmatpush1.msra.mxu0 %v69
    %1414 = vmatprep.subr.mxu0 0.0
    %1415 = vmatpush1.msra.mxu0 0.0
    %1416 = vmatprep.subr.mxu0 0.0
    %1417 = vmatpush1.msra.mxu0 0.0
    %1418 = vmatprep.subr.mxu0 0.0
    %1419 = vmatpush1.msra.mxu0 0.0
    %1420 = vmatprep.subr.mxu0 0.0
    %1421 = vmatpush1.msra.mxu0 0.0
    %1422 = vmatprep.subr.mxu0 0.0
    %1423 = vmatpush1.msra.mxu0 0.0
    %1424 = vmatprep.subr.mxu0 0.0
    %1425 = vmatpush1.msra.mxu0 0.0
    %1426 = vmatprep.subr.mxu0 0.0
    %1427 = vmatpush1.msra.mxu0 0.0
    %1428 = vmatprep.subr.mxu0 0.0
    %1429 = vmatpush1.msra.mxu0 0.0
    %1430 = vmatprep.subr.mxu0 0.0
    %1431 = vmatpush1.msra.mxu0 0.0
    %1432 = vmatprep.subr.mxu0 0.0
    %1433 = vmatpush1.msra.mxu0 0.0
    %1434 = vmatprep.subr.mxu0 0.0
    %1435 = vmatpush1.msra.mxu0 0.0
    %1436 = vmatprep.subr.mxu0 0.0
    %1437 = vmatpush1.msra.mxu0 0.0
    %1438 = vmatprep.subr.mxu0 0.0
    %1439 = vmatpush1.msra.mxu0 0.0
    %1440 = vmatprep.subr.mxu0 0.0
    %1441 = vmatpush1.msra.mxu0 0.0
    %1442 = vmatprep.subr.mxu0 0.0
    %1443 = vmatpush1.msra.mxu0 0.0
    %1444 = vmatprep.subr.mxu0 0.0
    %1445 = vmatpush1.msra.mxu0 0.0
    %1446 = vmatprep.subr.mxu0 0.0
    %1447 = vmatpush1.msra.mxu0 0.0
    %1448 = vmatprep.subr.mxu0 0.0
    %1449 = vmatpush1.msra.mxu0 0.0
    %1450 = vmatprep.subr.mxu0 0.0
    %1451 = vmatpush1.msra.mxu0 0.0
    %1452 = vmatprep.subr.mxu0 0.0
    %1453 = vmatpush1.msra.mxu0 0.0
    %1454 = vmatprep.subr.mxu0 0.0
    %1455 = vmatpush1.msra.mxu0 0.0
    %1456 = vmatprep.subr.mxu0 0.0
    %1457 = vmatpush1.msra.mxu0 0.0
    %1458 = vmatprep.subr.mxu0 0.0
    %1459 = vmatpush1.msra.mxu0 0.0
    %1460 = vmatprep.subr.mxu0 0.0
    %1461 = vmatpush1.msra.mxu0 0.0
    %1462 = vmatprep.subr.mxu0 0.0
    %1463 = vmatpush1.msra.mxu0 0.0
    %1464 = vmatprep.subr.mxu0 0.0
    %1465 = vmatpush1.msra.mxu0 0.0
    %1466 = vmatprep.subr.mxu0 0.0
    %1467 = vmatpush1.msra.mxu0 0.0
    %1468 = vmatprep.subr.mxu0 0.0
    %1469 = vmatpush1.msra.mxu0 0.0
    %1470 = vmatprep.mubr.f32.mxu0 0.0
    %1471 = vmatmul.mubr.f32.gmra.mrb[0].mxu0 %v1334
    %v1472 = vpop.f32.mrb[0].mxu0
    %v1473 = vadd.f32 %v175, %v1472
    %v1474 = vpop.f32.mrb[0].mxu0
    %1475 = vdwg.mxu0
    %1476 = vmatprep.subr.mxu0 0.0
    %1477 = vmatpush1.msra.mxu0 %v71
    %1478 = vmatprep.subr.mxu0 0.0
    %1479 = vmatpush1.msra.mxu0 %v72
    %1480 = vmatprep.subr.mxu0 0.0
    %1481 = vmatpush1.msra.mxu0 %v73
    %1482 = vmatprep.subr.mxu0 0.0
    %1483 = vmatpush1.msra.mxu0 %v74
    %1484 = vmatprep.subr.mxu0 0.0
    %1485 = vmatpush1.msra.mxu0 0.0
    %1486 = vmatprep.subr.mxu0 0.0
    %1487 = vmatpush1.msra.mxu0 0.0
    %1488 = vmatprep.subr.mxu0 0.0
    %1489 = vmatpush1.msra.mxu0 0.0
    %1490 = vmatprep.subr.mxu0 0.0
    %1491 = vmatpush1.msra.mxu0 0.0
    %1492 = vmatprep.subr.mxu0 0.0
    %1493 = vmatpush1.msra.mxu0 0.0
    %1494 = vmatprep.subr.mxu0 0.0
    %1495 = vmatpush1.msra.mxu0 0.0
    %1496 = vmatprep.subr.mxu0 0.0
    %1497 = vmatpush1.msra.mxu0 0.0
    %1498 = vmatprep.subr.mxu0 0.0
    %1499 = vmatpush1.msra.mxu0 0.0
    %1500 = vmatprep.subr.mxu0 0.0
    %1501 = vmatpush1.msra.mxu0 0.0
    %1502 = vmatprep.subr.mxu0 0.0
    %1503 = vmatpush1.msra.mxu0 0.0
    %1504 = vmatprep.subr.mxu0 0.0
    %1505 = vmatpush1.msra.mxu0 0.0
    %1506 = vmatprep.subr.mxu0 0.0
    %1507 = vmatpush1.msra.mxu0 0.0
    %1508 = vmatprep.subr.mxu0 0.0
    %1509 = vmatpush1.msra.mxu0 0.0
    %1510 = vmatprep.subr.mxu0 0.0
    %1511 = vmatpush1.msra.mxu0 0.0
    %1512 = vmatprep.subr.mxu0 0.0
    %1513 = vmatpush1.msra.mxu0 0.0
    %1514 = vmatprep.subr.mxu0 0.0
    %1515 = vmatpush1.msra.mxu0 0.0
    %1516 = vmatprep.subr.mxu0 0.0
    %1517 = vmatpush1.msra.mxu0 0.0
    %1518 = vmatprep.subr.mxu0 0.0
    %1519 = vmatpush1.msra.mxu0 0.0
    %1520 = vmatprep.subr.mxu0 0.0
    %1521 = vmatpush1.msra.mxu0 0.0
    %1522 = vmatprep.subr.mxu0 0.0
    %1523 = vmatpush1.msra.mxu0 0.0
    %1524 = vmatprep.subr.mxu0 0.0
    %1525 = vmatpush1.msra.mxu0 0.0
    %1526 = vmatprep.subr.mxu0 0.0
    %1527 = vmatpush1.msra.mxu0 0.0
    %1528 = vmatprep.subr.mxu0 0.0
    %1529 = vmatpush1.msra.mxu0 0.0
    %1530 = vmatprep.subr.mxu0 0.0
    %1531 = vmatpush1.msra.mxu0 0.0
    %1532 = vmatprep.subr.mxu0 0.0
    %1533 = vmatpush1.msra.mxu0 0.0
    %1534 = vmatprep.subr.mxu0 0.0
    %1535 = vmatpush1.msra.mxu0 0.0
    %1536 = vmatprep.subr.mxu0 0.0
    %1537 = vmatpush1.msra.mxu0 0.0
    %1538 = vmatprep.subr.mxu0 0.0
    %1539 = vmatpush1.msra.mxu0 0.0
    %1540 = vmatprep.mubr.f32.mxu0 0.0
    %1541 = vmatmul.mubr.f32.gmra.mrb[0].mxu0 %v1334
    %v1542 = vpop.f32.mrb[0].mxu0
    %v1543 = vadd.f32 %v251, %v1542
    %v1544 = vpop.f32.mrb[0].mxu0
    %1545 = vdwg.mxu0
    %v1546 = vadd.f32 %v1326, %v1403
    %v1547 = vxor.u32 %v1546, 2147483648
    %v1548 = vmul.f32 %v1547, 1.442695
    %v1549 = vpow.pop %v1548
    %v1550 = vadd.f32 %v1549, 1.0
    %v1551 = vrcp.pop %v1550
    %v1552 = vmul.f32 1.0, %v1551
    %v1553 = vadd.f32 %v1329, %v1473
    %v1554 = vxor.u32 %v1553, 2147483648
    %v1555 = vmul.f32 %v1554, 1.442695
    %v1556 = vpow.pop %v1555
    %v1557 = vadd.f32 %v1556, 1.0
    %v1558 = vrcp.pop %v1557
    %v1559 = vmul.f32 1.0, %v1558
    %v1560 = vmul.f32 %v1552, %v1543
    %v1561 = vadd.f32 %v1332, %v1560
    %v1562 = vtanh.pop %v1561
    %v1563 = vsub.f32 1.0, %v1559
    %v1564 = vmul.f32 %v1563, %v1562
    %v1565 = vmul.f32 %v1559, %v1321
    %v1566 = vadd.f32 %v1564, %v1565
    %s1567 = smul.u32 0, 4294967291
    %s1568 = sadd.s32 %s1567, 6
    %s1569 = smul.u32 %s1568, 8
    %s1570 = scalar_lea.vmem [#allocation3], %s1569
    %v1571 = vld [vmem:[%s1570] sm:$0xff]
    %s1572 = sadd.s32 %s1569, 64
    %s1573 = scalar_lea.vmem [#allocation3], %s1572
    %v1574 = vld [vmem:[%s1573] sm:$0xff]
    %s1575 = sadd.s32 %s1569, 128
    %s1576 = scalar_lea.vmem [#allocation3], %s1575
    %v1577 = vld [vmem:[%s1576] sm:$0xff]
    %v1579 = vsel %vm97, %v1566, 0
    %1581 = vmatprep.subr.mxu0 0.0
    %1582 = vmatpush1.msra.mxu0 %v61
    %1583 = vmatprep.subr.mxu0 0.0
    %1584 = vmatpush1.msra.mxu0 %v62
    %1585 = vmatprep.subr.mxu0 0.0
    %1586 = vmatpush1.msra.mxu0 %v63
    %1587 = vmatprep.subr.mxu0 0.0
    %1588 = vmatpush1.msra.mxu0 %v64
    %1589 = vmatprep.subr.mxu0 0.0
    %1590 = vmatpush1.msra.mxu0 0.0
    %1591 = vmatprep.subr.mxu0 0.0
    %1592 = vmatpush1.msra.mxu0 0.0
    %1593 = vmatprep.subr.mxu0 0.0
    %1594 = vmatpush1.msra.mxu0 0.0
    %1595 = vmatprep.subr.mxu0 0.0
    %1596 = vmatpush1.msra.mxu0 0.0
    %1597 = vmatprep.subr.mxu0 0.0
    %1598 = vmatpush1.msra.mxu0 0.0
    %1599 = vmatprep.subr.mxu0 0.0
    %1600 = vmatpush1.msra.mxu0 0.0
    %1601 = vmatprep.subr.mxu0 0.0
    %1602 = vmatpush1.msra.mxu0 0.0
    %1603 = vmatprep.subr.mxu0 0.0
    %1604 = vmatpush1.msra.mxu0 0.0
    %1605 = vmatprep.subr.mxu0 0.0
    %1606 = vmatpush1.msra.mxu0 0.0
    %1607 = vmatprep.subr.mxu0 0.0
    %1608 = vmatpush1.msra.mxu0 0.0
    %1609 = vmatprep.subr.mxu0 0.0
    %1610 = vmatpush1.msra.mxu0 0.0
    %1611 = vmatprep.subr.mxu0 0.0
    %1612 = vmatpush1.msra.mxu0 0.0
    %1613 = vmatprep.subr.mxu0 0.0
    %1614 = vmatpush1.msra.mxu0 0.0
    %1615 = vmatprep.subr.mxu0 0.0
    %1616 = vmatpush1.msra.mxu0 0.0
    %1617 = vmatprep.subr.mxu0 0.0
    %1618 = vmatpush1.msra.mxu0 0.0
    %1619 = vmatprep.subr.mxu0 0.0
    %1620 = vmatpush1.msra.mxu0 0.0
    %1621 = vmatprep.subr.mxu0 0.0
    %1622 = vmatpush1.msra.mxu0 0.0
    %1623 = vmatprep.subr.mxu0 0.0
    %1624 = vmatpush1.msra.mxu0 0.0
    %1625 = vmatprep.subr.mxu0 0.0
    %1626 = vmatpush1.msra.mxu0 0.0
    %1627 = vmatprep.subr.mxu0 0.0
    %1628 = vmatpush1.msra.mxu0 0.0
    %1629 = vmatprep.subr.mxu0 0.0
    %1630 = vmatpush1.msra.mxu0 0.0
    %1631 = vmatprep.subr.mxu0 0.0
    %1632 = vmatpush1.msra.mxu0 0.0
    %1633 = vmatprep.subr.mxu0 0.0
    %1634 = vmatpush1.msra.mxu0 0.0
    %1635 = vmatprep.subr.mxu0 0.0
    %1636 = vmatpush1.msra.mxu0 0.0
    %1637 = vmatprep.subr.mxu0 0.0
    %1638 = vmatpush1.msra.mxu0 0.0
    %1639 = vmatprep.subr.mxu0 0.0
    %1640 = vmatpush1.msra.mxu0 0.0
    %1641 = vmatprep.subr.mxu0 0.0
    %1642 = vmatpush1.msra.mxu0 0.0
    %1643 = vmatprep.subr.mxu0 0.0
    %1644 = vmatpush1.msra.mxu0 0.0
    %1645 = vmatprep.mubr.f32.mxu0 0.0
    %1646 = vmatmul.mubr.f32.gmra.mrb[0].mxu0 %v1579
    %v1647 = vpop.f32.mrb[0].mxu0
    %v1648 = vadd.f32 %v95, %v1647
    %v1649 = vpop.f32.mrb[0].mxu0
    %1650 = vdwg.mxu0
    %1651 = vmatprep.subr.mxu0 0.0
    %1652 = vmatpush1.msra.mxu0 %v66
    %1653 = vmatprep.subr.mxu0 0.0
    %1654 = vmatpush1.msra.mxu0 %v67
    %1655 = vmatprep.subr.mxu0 0.0
    %1656 = vmatpush1.msra.mxu0 %v68
    %1657 = vmatprep.subr.mxu0 0.0
    %1658 = vmatpush1.msra.mxu0 %v69
    %1659 = vmatprep.subr.mxu0 0.0
    %1660 = vmatpush1.msra.mxu0 0.0
    %1661 = vmatprep.subr.mxu0 0.0
    %1662 = vmatpush1.msra.mxu0 0.0
    %1663 = vmatprep.subr.mxu0 0.0
    %1664 = vmatpush1.msra.mxu0 0.0
    %1665 = vmatprep.subr.mxu0 0.0
    %1666 = vmatpush1.msra.mxu0 0.0
    %1667 = vmatprep.subr.mxu0 0.0
    %1668 = vmatpush1.msra.mxu0 0.0
    %1669 = vmatprep.subr.mxu0 0.0
    %1670 = vmatpush1.msra.mxu0 0.0
    %1671 = vmatprep.subr.mxu0 0.0
    %1672 = vmatpush1.msra.mxu0 0.0
    %1673 = vmatprep.subr.mxu0 0.0
    %1674 = vmatpush1.msra.mxu0 0.0
    %1675 = vmatprep.subr.mxu0 0.0
    %1676 = vmatpush1.msra.mxu0 0.0
    %1677 = vmatprep.subr.mxu0 0.0
    %1678 = vmatpush1.msra.mxu0 0.0
    %1679 = vmatprep.subr.mxu0 0.0
    %1680 = vmatpush1.msra.mxu0 0.0
    %1681 = vmatprep.subr.mxu0 0.0
    %1682 = vmatpush1.msra.mxu0 0.0
    %1683 = vmatprep.subr.mxu0 0.0
    %1684 = vmatpush1.msra.mxu0 0.0
    %1685 = vmatprep.subr.mxu0 0.0
    %1686 = vmatpush1.msra.mxu0 0.0
    %1687 = vmatprep.subr.mxu0 0.0
    %1688 = vmatpush1.msra.mxu0 0.0
    %1689 = vmatprep.subr.mxu0 0.0
    %1690 = vmatpush1.msra.mxu0 0.0
    %1691 = vmatprep.subr.mxu0 0.0
    %1692 = vmatpush1.msra.mxu0 0.0
    %1693 = vmatprep.subr.mxu0 0.0
    %1694 = vmatpush1.msra.mxu0 0.0
    %1695 = vmatprep.subr.mxu0 0.0
    %1696 = vmatpush1.msra.mxu0 0.0
    %1697 = vmatprep.subr.mxu0 0.0
    %1698 = vmatpush1.msra.mxu0 0.0
    %1699 = vmatprep.subr.mxu0 0.0
    %1700 = vmatpush1.msra.mxu0 0.0
    %1701 = vmatprep.subr.mxu0 0.0
    %1702 = vmatpush1.msra.mxu0 0.0
    %1703 = vmatprep.subr.mxu0 0.0
    %1704 = vmatpush1.msra.mxu0 0.0
    %1705 = vmatprep.subr.mxu0 0.0
    %1706 = vmatpush1.msra.mxu0 0.0
    %1707 = vmatprep.subr.mxu0 0.0
    %1708 = vmatpush1.msra.mxu0 0.0
    %1709 = vmatprep.subr.mxu0 0.0
    %1710 = vmatpush1.msra.mxu0 0.0
    %1711 = vmatprep.subr.mxu0 0.0
    %1712 = vmatpush1.msra.mxu0 0.0
    %1713 = vmatprep.subr.mxu0 0.0
    %1714 = vmatpush1.msra.mxu0 0.0
    %1715 = vmatprep.mubr.f32.mxu0 0.0
    %1716 = vmatmul.mubr.f32.gmra.mrb[0].mxu0 %v1579
    %v1717 = vpop.f32.mrb[0].mxu0
    %v1718 = vadd.f32 %v175, %v1717
    %v1719 = vpop.f32.mrb[0].mxu0
    %1720 = vdwg.mxu0
    %1721 = vmatprep.subr.mxu0 0.0
    %1722 = vmatpush1.msra.mxu0 %v71
    %1723 = vmatprep.subr.mxu0 0.0
    %1724 = vmatpush1.msra.mxu0 %v72
    %1725 = vmatprep.subr.mxu0 0.0
    %1726 = vmatpush1.msra.mxu0 %v73
    %1727 = vmatprep.subr.mxu0 0.0
    %1728 = vmatpush1.msra.mxu0 %v74
    %1729 = vmatprep.subr.mxu0 0.0
    %1730 = vmatpush1.msra.mxu0 0.0
    %1731 = vmatprep.subr.mxu0 0.0
    %1732 = vmatpush1.msra.mxu0 0.0
    %1733 = vmatprep.subr.mxu0 0.0
    %1734 = vmatpush1.msra.mxu0 0.0
    %1735 = vmatprep.subr.mxu0 0.0
    %1736 = vmatpush1.msra.mxu0 0.0
    %1737 = vmatprep.subr.mxu0 0.0
    %1738 = vmatpush1.msra.mxu0 0.0
    %1739 = vmatprep.subr.mxu0 0.0
    %1740 = vmatpush1.msra.mxu0 0.0
    %1741 = vmatprep.subr.mxu0 0.0
    %1742 = vmatpush1.msra.mxu0 0.0
    %1743 = vmatprep.subr.mxu0 0.0
    %1744 = vmatpush1.msra.mxu0 0.0
    %1745 = vmatprep.subr.mxu0 0.0
    %1746 = vmatpush1.msra.mxu0 0.0
    %1747 = vmatprep.subr.mxu0 0.0
    %1748 = vmatpush1.msra.mxu0 0.0
    %1749 = vmatprep.subr.mxu0 0.0
    %1750 = vmatpush1.msra.mxu0 0.0
    %1751 = vmatprep.subr.mxu0 0.0
    %1752 = vmatpush1.msra.mxu0 0.0
    %1753 = vmatprep.subr.mxu0 0.0
    %1754 = vmatpush1.msra.mxu0 0.0
    %1755 = vmatprep.subr.mxu0 0.0
    %1756 = vmatpush1.msra.mxu0 0.0
    %1757 = vmatprep.subr.mxu0 0.0
    %1758 = vmatpush1.msra.mxu0 0.0
    %1759 = vmatprep.subr.mxu0 0.0
    %1760 = vmatpush1.msra.mxu0 0.0
    %1761 = vmatprep.subr.mxu0 0.0
    %1762 = vmatpush1.msra.mxu0 0.0
    %1763 = vmatprep.subr.mxu0 0.0
    %1764 = vmatpush1.msra.mxu0 0.0
    %1765 = vmatprep.subr.mxu0 0.0
    %1766 = vmatpush1.msra.mxu0 0.0
    %1767 = vmatprep.subr.mxu0 0.0
    %1768 = vmatpush1.msra.mxu0 0.0
    %1769 = vmatprep.subr.mxu0 0.0
    %1770 = vmatpush1.msra.mxu0 0.0
    %1771 = vmatprep.subr.mxu0 0.0
    %1772 = vmatpush1.msra.mxu0 0.0
    %1773 = vmatprep.subr.mxu0 0.0
    %1774 = vmatpush1.msra.mxu0 0.0
    %1775 = vmatprep.subr.mxu0 0.0
    %1776 = vmatpush1.msra.mxu0 0.0
    %1777 = vmatprep.subr.mxu0 0.0
    %1778 = vmatpush1.msra.mxu0 0.0
    %1779 = vmatprep.subr.mxu0 0.0
    %1780 = vmatpush1.msra.mxu0 0.0
    %1781 = vmatprep.subr.mxu0 0.0
    %1782 = vmatpush1.msra.mxu0 0.0
    %1783 = vmatprep.subr.mxu0 0.0
    %1784 = vmatpush1.msra.mxu0 0.0
    %1785 = vmatprep.mubr.f32.mxu0 0.0
    %1786 = vmatmul.mubr.f32.gmra.mrb[0].mxu0 %v1579
    %v1787 = vpop.f32.mrb[0].mxu0
    %v1788 = vadd.f32 %v251, %v1787
    %v1789 = vpop.f32.mrb[0].mxu0
    %1790 = vdwg.mxu0
    %v1791 = vadd.f32 %v1571, %v1648
    %v1792 = vxor.u32 %v1791, 2147483648
    %v1793 = vmul.f32 %v1792, 1.442695
    %v1794 = vpow.pop %v1793
    %v1795 = vadd.f32 %v1794, 1.0
    %v1796 = vrcp.pop %v1795
    %v1797 = vmul.f32 1.0, %v1796
    %v1798 = vadd.f32 %v1574, %v1718
    %v1799 = vxor.u32 %v1798, 2147483648
    %v1800 = vmul.f32 %v1799, 1.442695
    %v1801 = vpow.pop %v1800
    %v1802 = vadd.f32 %v1801, 1.0
    %v1803 = vrcp.pop %v1802
    %v1804 = vmul.f32 1.0, %v1803
    %v1805 = vmul.f32 %v1797, %v1788
    %v1806 = vadd.f32 %v1577, %v1805
    %v1807 = vtanh.pop %v1806
    %v1808 = vsub.f32 1.0, %v1804
    %v1809 = vmul.f32 %v1808, %v1807
    %v1810 = vmul.f32 %v1804, %v1566
    %v1811 = vadd.f32 %v1809, %v1810
    %s1812 = smul.u32 0, 4294967289
    %s1813 = sadd.s32 %s1812, 7
    %s1814 = smul.u32 %s1813, 8
    %s1815 = scalar_lea.vmem [#allocation3], %s1814
    %v1816 = vld [vmem:[%s1815] sm:$0xff]
    %s1817 = sadd.s32 %s1814, 64
    %s1818 = scalar_lea.vmem [#allocation3], %s1817
    %v1819 = vld [vmem:[%s1818] sm:$0xff]
    %s1820 = sadd.s32 %s1814, 128
    %s1821 = scalar_lea.vmem [#allocation3], %s1820
    %v1822 = vld [vmem:[%s1821] sm:$0xff]
    %v1824 = vsel %vm97, %v1811, 0
    %1826 = vmatprep.subr.mxu0 0.0
    %1827 = vmatpush1.msra.mxu0 %v61
    %1828 = vmatprep.subr.mxu0 0.0
    %1829 = vmatpush1.msra.mxu0 %v62
    %1830 = vmatprep.subr.mxu0 0.0
    %1831 = vmatpush1.msra.mxu0 %v63
    %1832 = vmatprep.subr.mxu0 0.0
    %1833 = vmatpush1.msra.mxu0 %v64
    %1834 = vmatprep.subr.mxu0 0.0
    %1835 = vmatpush1.msra.mxu0 0.0
    %1836 = vmatprep.subr.mxu0 0.0
    %1837 = vmatpush1.msra.mxu0 0.0
    %1838 = vmatprep.subr.mxu0 0.0
    %1839 = vmatpush1.msra.mxu0 0.0
    %1840 = vmatprep.subr.mxu0 0.0
    %1841 = vmatpush1.msra.mxu0 0.0
    %1842 = vmatprep.subr.mxu0 0.0
    %1843 = vmatpush1.msra.mxu0 0.0
    %1844 = vmatprep.subr.mxu0 0.0
    %1845 = vmatpush1.msra.mxu0 0.0
    %1846 = vmatprep.subr.mxu0 0.0
    %1847 = vmatpush1.msra.mxu0 0.0
    %1848 = vmatprep.subr.mxu0 0.0
    %1849 = vmatpush1.msra.mxu0 0.0
    %1850 = vmatprep.subr.mxu0 0.0
    %1851 = vmatpush1.msra.mxu0 0.0
    %1852 = vmatprep.subr.mxu0 0.0
    %1853 = vmatpush1.msra.mxu0 0.0
    %1854 = vmatprep.subr.mxu0 0.0
    %1855 = vmatpush1.msra.mxu0 0.0
    %1856 = vmatprep.subr.mxu0 0.0
    %1857 = vmatpush1.msra.mxu0 0.0
    %1858 = vmatprep.subr.mxu0 0.0
    %1859 = vmatpush1.msra.mxu0 0.0
    %1860 = vmatprep.subr.mxu0 0.0
    %1861 = vmatpush1.msra.mxu0 0.0
    %1862 = vmatprep.subr.mxu0 0.0
    %1863 = vmatpush1.msra.mxu0 0.0
    %1864 = vmatprep.subr.mxu0 0.0
    %1865 = vmatpush1.msra.mxu0 0.0
    %1866 = vmatprep.subr.mxu0 0.0
    %1867 = vmatpush1.msra.mxu0 0.0
    %1868 = vmatprep.subr.mxu0 0.0
    %1869 = vmatpush1.msra.mxu0 0.0
    %1870 = vmatprep.subr.mxu0 0.0
    %1871 = vmatpush1.msra.mxu0 0.0
    %1872 = vmatprep.subr.mxu0 0.0
    %1873 = vmatpush1.msra.mxu0 0.0
    %1874 = vmatprep.subr.mxu0 0.0
    %1875 = vmatpush1.msra.mxu0 0.0
    %1876 = vmatprep.subr.mxu0 0.0
    %1877 = vmatpush1.msra.mxu0 0.0
    %1878 = vmatprep.subr.mxu0 0.0
    %1879 = vmatpush1.msra.mxu0 0.0
    %1880 = vmatprep.subr.mxu0 0.0
    %1881 = vmatpush1.msra.mxu0 0.0
    %1882 = vmatprep.subr.mxu0 0.0
    %1883 = vmatpush1.msra.mxu0 0.0
    %1884 = vmatprep.subr.mxu0 0.0
    %1885 = vmatpush1.msra.mxu0 0.0
    %1886 = vmatprep.subr.mxu0 0.0
    %1887 = vmatpush1.msra.mxu0 0.0
    %1888 = vmatprep.subr.mxu0 0.0
    %1889 = vmatpush1.msra.mxu0 0.0
    %1890 = vmatprep.mubr.f32.mxu0 0.0
    %1891 = vmatmul.mubr.f32.gmra.mrb[0].mxu0 %v1824
    %v1892 = vpop.f32.mrb[0].mxu0
    %v1893 = vadd.f32 %v95, %v1892
    %v1894 = vpop.f32.mrb[0].mxu0
    %1895 = vdwg.mxu0
    %1896 = vmatprep.subr.mxu0 0.0
    %1897 = vmatpush1.msra.mxu0 %v66
    %1898 = vmatprep.subr.mxu0 0.0
    %1899 = vmatpush1.msra.mxu0 %v67
    %1900 = vmatprep.subr.mxu0 0.0
    %1901 = vmatpush1.msra.mxu0 %v68
    %1902 = vmatprep.subr.mxu0 0.0
    %1903 = vmatpush1.msra.mxu0 %v69
    %1904 = vmatprep.subr.mxu0 0.0
    %1905 = vmatpush1.msra.mxu0 0.0
    %1906 = vmatprep.subr.mxu0 0.0
    %1907 = vmatpush1.msra.mxu0 0.0
    %1908 = vmatprep.subr.mxu0 0.0
    %1909 = vmatpush1.msra.mxu0 0.0
    %1910 = vmatprep.subr.mxu0 0.0
    %1911 = vmatpush1.msra.mxu0 0.0
    %1912 = vmatprep.subr.mxu0 0.0
    %1913 = vmatpush1.msra.mxu0 0.0
    %1914 = vmatprep.subr.mxu0 0.0
    %1915 = vmatpush1.msra.mxu0 0.0
    %1916 = vmatprep.subr.mxu0 0.0
    %1917 = vmatpush1.msra.mxu0 0.0
    %1918 = vmatprep.subr.mxu0 0.0
    %1919 = vmatpush1.msra.mxu0 0.0
    %1920 = vmatprep.subr.mxu0 0.0
    %1921 = vmatpush1.msra.mxu0 0.0
    %1922 = vmatprep.subr.mxu0 0.0
    %1923 = vmatpush1.msra.mxu0 0.0
    %1924 = vmatprep.subr.mxu0 0.0
    %1925 = vmatpush1.msra.mxu0 0.0
    %1926 = vmatprep.subr.mxu0 0.0
    %1927 = vmatpush1.msra.mxu0 0.0
    %1928 = vmatprep.subr.mxu0 0.0
    %1929 = vmatpush1.msra.mxu0 0.0
    %1930 = vmatprep.subr.mxu0 0.0
    %1931 = vmatpush1.msra.mxu0 0.0
    %1932 = vmatprep.subr.mxu0 0.0
    %1933 = vmatpush1.msra.mxu0 0.0
    %1934 = vmatprep.subr.mxu0 0.0
    %1935 = vmatpush1.msra.mxu0 0.0
    %1936 = vmatprep.subr.mxu0 0.0
    %1937 = vmatpush1.msra.mxu0 0.0
    %1938 = vmatprep.subr.mxu0 0.0
    %1939 = vmatpush1.msra.mxu0 0.0
    %1940 = vmatprep.subr.mxu0 0.0
    %1941 = vmatpush1.msra.mxu0 0.0
    %1942 = vmatprep.subr.mxu0 0.0
    %1943 = vmatpush1.msra.mxu0 0.0
    %1944 = vmatprep.subr.mxu0 0.0
    %1945 = vmatpush1.msra.mxu0 0.0
    %1946 = vmatprep.subr.mxu0 0.0
    %1947 = vmatpush1.msra.mxu0 0.0
    %1948 = vmatprep.subr.mxu0 0.0
    %1949 = vmatpush1.msra.mxu0 0.0
    %1950 = vmatprep.subr.mxu0 0.0
    %1951 = vmatpush1.msra.mxu0 0.0
    %1952 = vmatprep.subr.mxu0 0.0
    %1953 = vmatpush1.msra.mxu0 0.0
    %1954 = vmatprep.subr.mxu0 0.0
    %1955 = vmatpush1.msra.mxu0 0.0
    %1956 = vmatprep.subr.mxu0 0.0
    %1957 = vmatpush1.msra.mxu0 0.0
    %1958 = vmatprep.subr.mxu0 0.0
    %1959 = vmatpush1.msra.mxu0 0.0
    %1960 = vmatprep.mubr.f32.mxu0 0.0
    %1961 = vmatmul.mubr.f32.gmra.mrb[0].mxu0 %v1824
    %v1962 = vpop.f32.mrb[0].mxu0
    %v1963 = vadd.f32 %v175, %v1962
    %v1964 = vpop.f32.mrb[0].mxu0
    %1965 = vdwg.mxu0
    %1966 = vmatprep.subr.mxu0 0.0
    %1967 = vmatpush1.msra.mxu0 %v71
    %1968 = vmatprep.subr.mxu0 0.0
    %1969 = vmatpush1.msra.mxu0 %v72
    %1970 = vmatprep.subr.mxu0 0.0
    %1971 = vmatpush1.msra.mxu0 %v73
    %1972 = vmatprep.subr.mxu0 0.0
    %1973 = vmatpush1.msra.mxu0 %v74
    %1974 = vmatprep.subr.mxu0 0.0
    %1975 = vmatpush1.msra.mxu0 0.0
    %1976 = vmatprep.subr.mxu0 0.0
    %1977 = vmatpush1.msra.mxu0 0.0
    %1978 = vmatprep.subr.mxu0 0.0
    %1979 = vmatpush1.msra.mxu0 0.0
    %1980 = vmatprep.subr.mxu0 0.0
    %1981 = vmatpush1.msra.mxu0 0.0
    %1982 = vmatprep.subr.mxu0 0.0
    %1983 = vmatpush1.msra.mxu0 0.0
    %1984 = vmatprep.subr.mxu0 0.0
    %1985 = vmatpush1.msra.mxu0 0.0
    %1986 = vmatprep.subr.mxu0 0.0
    %1987 = vmatpush1.msra.mxu0 0.0
    %1988 = vmatprep.subr.mxu0 0.0
    %1989 = vmatpush1.msra.mxu0 0.0
    %1990 = vmatprep.subr.mxu0 0.0
    %1991 = vmatpush1.msra.mxu0 0.0
    %1992 = vmatprep.subr.mxu0 0.0
    %1993 = vmatpush1.msra.mxu0 0.0
    %1994 = vmatprep.subr.mxu0 0.0
    %1995 = vmatpush1.msra.mxu0 0.0
    %1996 = vmatprep.subr.mxu0 0.0
    %1997 = vmatpush1.msra.mxu0 0.0
    %1998 = vmatprep.subr.mxu0 0.0
    %1999 = vmatpush1.msra.mxu0 0.0
    %2000 = vmatprep.subr.mxu0 0.0
    %2001 = vmatpush1.msra.mxu0 0.0
    %2002 = vmatprep.subr.mxu0 0.0
    %2003 = vmatpush1.msra.mxu0 0.0
    %2004 = vmatprep.subr.mxu0 0.0
    %2005 = vmatpush1.msra.mxu0 0.0
    %2006 = vmatprep.subr.mxu0 0.0
    %2007 = vmatpush1.msra.mxu0 0.0
    %2008 = vmatprep.subr.mxu0 0.0
    %2009 = vmatpush1.msra.mxu0 0.0
    %2010 = vmatprep.subr.mxu0 0.0
    %2011 = vmatpush1.msra.mxu0 0.0
    %2012 = vmatprep.subr.mxu0 0.0
    %2013 = vmatpush1.msra.mxu0 0.0
    %2014 = vmatprep.subr.mxu0 0.0
    %2015 = vmatpush1.msra.mxu0 0.0
    %2016 = vmatprep.subr.mxu0 0.0
    %2017 = vmatpush1.msra.mxu0 0.0
    %2018 = vmatprep.subr.mxu0 0.0
    %2019 = vmatpush1.msra.mxu0 0.0
    %2020 = vmatprep.subr.mxu0 0.0
    %2021 = vmatpush1.msra.mxu0 0.0
    %2022 = vmatprep.subr.mxu0 0.0
    %2023 = vmatpush1.msra.mxu0 0.0
    %2024 = vmatprep.subr.mxu0 0.0
    %2025 = vmatpush1.msra.mxu0 0.0
    %2026 = vmatprep.subr.mxu0 0.0
    %2027 = vmatpush1.msra.mxu0 0.0
    %2028 = vmatprep.subr.mxu0 0.0
    %2029 = vmatpush1.msra.mxu0 0.0
    %2030 = vmatprep.mubr.f32.mxu0 0.0
    %2031 = vmatmul.mubr.f32.gmra.mrb[0].mxu0 %v1824
    %v2032 = vpop.f32.mrb[0].mxu0
    %v2033 = vadd.f32 %v251, %v2032
    %v2034 = vpop.f32.mrb[0].mxu0
    %2035 = vdwg.mxu0
    %v2036 = vadd.f32 %v1816, %v1893
    %v2037 = vxor.u32 %v2036, 2147483648
    %v2038 = vmul.f32 %v2037, 1.442695
    %v2039 = vpow.pop %v2038
    %v2040 = vadd.f32 %v2039, 1.0
    %v2041 = vrcp.pop %v2040
    %v2042 = vmul.f32 1.0, %v2041
    %v2043 = vadd.f32 %v1819, %v1963
    %v2044 = vxor.u32 %v2043, 2147483648
    %v2045 = vmul.f32 %v2044, 1.442695
    %v2046 = vpow.pop %v2045
    %v2047 = vadd.f32 %v2046, 1.0
    %v2048 = vrcp.pop %v2047
    %v2049 = vmul.f32 1.0, %v2048
    %v2050 = vmul.f32 %v2042, %v2033
    %v2051 = vadd.f32 %v1822, %v2050
    %v2052 = vtanh.pop %v2051
    %v2053 = vsub.f32 1.0, %v2049
    %v2054 = vmul.f32 %v2053, %v2052
    %v2055 = vmul.f32 %v2049, %v1811
    %v2056 = vadd.f32 %v2054, %v2055
    %2057 = vst.msk [vmem:[#allocation2] sm:$0xff] %vm97, %v2056
    // Predicated region
    $region26: #{tpu_custom_call.1} parent=1 // pred_check
      %p2058 = pneg %p55
    $region27: #{tpu_custom_call.1} parent=1 // pred_check_branch
      %2060 = sbr.rel (%p2058) target = $region29
    $region28: #{tpu_custom_call.1} parent=1 // pred_region
      %2061 = vst.msk [vmem:[#allocation8] sm:$0xff] %vm97, %v2056
    $region29: #{tpu_custom_call.1} parent=1 // pred_fallthru
      _
    // Predicated region
    $region30: #{tpu_custom_call.1} parent=1 // pred_check
      _
    $region31: #{tpu_custom_call.1} parent=1 // pred_check_branch
      %2063 = sbr.rel (0) target = $region33
    $region32: #{tpu_custom_call.1} parent=1 // pred_region
      %s2065 = ssub.s32 128, 128
      %2066 = vsyncadd [#allocation5], %s2065
      %s2068 = sshll.u32 [#allocation8], 4
      %s2069 = int_to_ptr.vmem [resolvable:$true] %s2068
      %2071 = dma.vmem_to_hbm [thread:$0]  %s2069, 128, %s3, [#allocation5]
    $region33: #{tpu_custom_call.1} parent=1 // pred_fallthru
      _
    // Predicated region
    $region34: #{tpu_custom_call.1} parent=1 // pred_check
      _
    $region35: #{tpu_custom_call.1} parent=1 // pred_check_branch
      %2073 = sbr.rel (0) target = $region37
    $region36: #{tpu_custom_call.1} parent=1 // pred_region
      %2074 = dma.done [#allocation5], 128
    $region37: #{tpu_custom_call.1} parent=1 // pred_fallthru
      _
    %2075 = vsyncpa [#allocation4], 1
    %2076 = vsyncpa [#allocation7], 1
    %2077 = vsyncpa [#allocation5], 1

</llo_original>
